<compile_context>
chip_gen: v5e
topology: v5e:2x2
jax: 0.10.0
libtpu: 0.0.40
codegen_flags: <defaults>
</compile_context>

<pallas_src>
import math

import jax
import jax.numpy as jnp
from jax.experimental import pallas as pl
from jax.experimental.pallas import tpu as pltpu

EPS = 1e-5
_LANE = 128
_SUBLANE = 8


def _round_up(n, m):
    return ((n + m - 1) // m) * m


def _chip_info():
    """(vmem_capacity_bytes, tensorcores_per_chip) with conservative v7x defaults."""
    vmem = 64 * 1024 * 1024
    cores = 2
    try:
        info = pltpu.get_tpu_info()
        vmem = int(getattr(info, "vmem_capacity_bytes", vmem) or vmem)
        for name in ("num_tensorcores", "tensorcores_per_chip", "num_cores",
                     "cores_per_chip"):
            v = getattr(info, name, None)
            if v:
                cores = int(v)
                break
    except Exception:
        pass
    return vmem, cores


def _tile_budget():
    """Per-buffer tile-byte target + vmem_limit, sized per chip generation."""
    vmem, cores = _chip_info()
    if vmem >= 100 * 1024 * 1024:
        # v5e / v6e: 128 MiB VMEM -> bigger tiles further amortize ~0.35us/step.
        tile_bytes = 12 * 1024 * 1024
        vmem_limit = 96 * 1024 * 1024
    else:
        # v7x: 64 MiB VMEM -> keep 2x(in+out) double-buffered footprint < ~44 MiB.
        tile_bytes = 8 * 1024 * 1024
        vmem_limit = 44 * 1024 * 1024
    return tile_bytes, vmem_limit, cores


# --------------------------------------------------------------------------- #
# Channels-first kernel: tile (C, TN), C on sublanes, tokens/pixels on lanes.  #
# --------------------------------------------------------------------------- #
def _ln_cf_kernel(x_ref, w_ref, o_ref):
    x = x_ref[...]                                   # (C, TN), lane-dense
    xf = x.astype(jnp.float32)
    # One-pass biased variance: E[x^2] - mu^2.  Output is NOT mean-centered,
    # which is exactly BiasFree_LayerNorm.  Clamp at 0 so cancellation can never
    # push var + eps negative and NaN the rsqrt.
    mu = jnp.mean(xf, axis=0, keepdims=True)         # (1, TN)
    ms = jnp.mean(xf * xf, axis=0, keepdims=True)    # (1, TN)
    var = jnp.maximum(ms - mu * mu, 0.0)
    inv = jax.lax.rsqrt(var + EPS)                   # (1, TN)
    w = w_ref[...]                                   # (C, 1)
    if o_ref.dtype == jnp.float32:
        o_ref[...] = xf * inv * w.astype(jnp.float32)
    else:
        # bf16 etc.: stats in f32 above, final scale in the native dtype.
        o_ref[...] = (x * inv.astype(x.dtype) * w.astype(x.dtype)).astype(o_ref.dtype)


def _ln_cf_call(x3, weight):
    """x3: (B, C, N), normalize over axis 1.  No pads, no transposes."""
    B, C, N = x3.shape
    itemsize = jnp.dtype(x3.dtype).itemsize
    tile_bytes, vmem_limit, cores = _tile_budget()

    # Lane tile: multiple of 128, sized toward the per-buffer byte target,
    # clamped to the lane-padded extent.  Ragged last block handled by Pallas
    # (masked stores); columns are independent so OOB junk never leaks.
    n_pad = _round_up(N, _LANE)
    tn = max(_LANE, (tile_bytes // max(C * itemsize, 1)) // _LANE * _LANE)
    tn = min(tn, n_pad)

    # Only force extra grid steps when it buys cross-TensorCore sharding and the
    # problem is big enough to care; on 1-TC chips an extra step is pure overhead.
    total_bytes = B * C * N * itemsize
    if (cores > 1 and B * pl.cdiv(N, tn) < cores and N >= cores * _LANE
            and total_bytes >= (2 << 20)):
        tn = _round_up(pl.cdiv(N, cores), _LANE)

    grid = (B, pl.cdiv(N, tn))
    w2 = weight.reshape(C, 1)

    flops = 6 * B * C * N
    bytes_accessed = 2 * B * C * N * itemsize + C * itemsize

    return pl.pallas_call(
        _ln_cf_kernel,
        out_shape=jax.ShapeDtypeStruct((B, C, N), x3.dtype),
        grid_spec=pltpu.PrefetchScalarGridSpec(
            num_scalar_prefetch=0,
            grid=grid,
            in_specs=[
                pl.BlockSpec((None, C, tn), lambda b, i: (b, 0, i)),
                pl.BlockSpec((C, 1), lambda b, i: (0, 0)),        # weight, resident
            ],
            out_specs=pl.BlockSpec((None, C, tn), lambda b, i: (b, 0, i)),
        ),
        compiler_params=pltpu.CompilerParams(
            dimension_semantics=("parallel", "parallel"),
            vmem_limit_bytes=vmem_limit,
        ),
        cost_estimate=pl.CostEstimate(
            flops=flops, transcendentals=B * N, bytes_accessed=bytes_accessed),
    )(x3, w2)


def biasfree_layernorm_cf(x_cf, weight):
    """BiasFree LayerNorm on a single channels-first (C, N) slab (reduce axis 0)."""
    C, N = x_cf.shape
    assert weight.shape == (C,)
    return _ln_cf_call(x_cf[None], weight)[0]


def biasfree_layernorm_nchw(x, weight):
    """BiasFree LayerNorm over the channel dim of an NCHW tensor (B, C, H, W).

    Zero-layout-cost path for UHDDIP: equivalent to
    to_4d(BiasFree_LayerNorm(to_3d(x)), h, w) with no transposes or pads.
    """
    B, C, H, W = x.shape
    assert weight.shape == (C,)
    out = _ln_cf_call(x.reshape(B, C, H * W), weight)   # free reshape
    return out.reshape(B, C, H, W)


# --------------------------------------------------------------------------- #
# Channels-last "packed" kernel (C | 128): G = 128//C tokens per 128-lane row. #
# --------------------------------------------------------------------------- #
def _make_cl_packed_kernel(C):
    shifts = []
    s = 1
    while s < C:
        shifts.append(s)
        s *= 2

    def kernel(x_ref, w_ref, o_ref):
        x = x_ref[...]                               # (TR, 128) lane-dense
        xf = x.astype(jnp.float32)
        # Exact segmented (per C-lane group) all-reduce of sum(x) and sum(x^2)
        # via an XOR-butterfly of lane rotations: log2(C) steps, after which
        # every lane of a group holds the full group sum.  Rolls ride the XLU
        # slot; VPU work stays ~O(1) per element, so the kernel remains
        # DMA-bound on v5e/v6e (the channels-first kernels are preferred on v7x).
        lane = jax.lax.broadcasted_iota(jnp.int32, (1, _LANE), 1)
        s1 = xf
        s2 = xf * xf
        for s in shifts:
            a1 = pltpu.roll(s1, s, axis=1)
            b1 = pltpu.roll(s1, _LANE - s, axis=1)
            a2 = pltpu.roll(s2, s, axis=1)
            b2 = pltpu.roll(s2, _LANE - s, axis=1)
            # Roll the lane iota identically so partner selection is independent
            # of the roll direction convention: pick whichever roll actually
            # delivers lane XOR s to each destination lane.
            ia = pltpu.roll(lane, s, axis=1)
            take_a = ia == jnp.bitwise_xor(lane, s)  # (1, 128) mask
            s1 = s1 + jnp.where(take_a, a1, b1)
            s2 = s2 + jnp.where(take_a, a2, b2)
        inv_c = jnp.float32(1.0 / C)
        mu = s1 * inv_c
        ms = s2 * inv_c
        var = jnp.maximum(ms - mu * mu, 0.0)
        inv = jax.lax.rsqrt(var + EPS)               # (TR, 128)
        w = w_ref[...]                               # (1, 128) packed weight
        if o_ref.dtype == jnp.float32:
            o_ref[...] = xf * inv * w.astype(jnp.float32)
        else:
            o_ref[...] = (x * inv.astype(x.dtype) * w.astype(x.dtype)).astype(o_ref.dtype)

    return kernel


def _ln_cl_packed_call(x2, weight):
    """x2: (rows, C) channels-last with C | 128 and rows % (128 // C) == 0."""
    rows, C = x2.shape
    G = _LANE // C
    R2 = rows // G
    itemsize = jnp.dtype(x2.dtype).itemsize
    tile_bytes, vmem_limit, cores = _tile_budget()

    xp = x2.reshape(R2, _LANE)                       # free reshape (contiguous)
    wp = jnp.tile(weight, G).reshape(1, _LANE)       # lane l -> weight[l % C]

    r_pad = _round_up(R2, _SUBLANE)
    tr = max(_SUBLANE,
             (tile_bytes // (_LANE * itemsize)) // _SUBLANE * _SUBLANE)
    tr = min(tr, r_pad)

    total_bytes = rows * C * itemsize
    if (cores > 1 and pl.cdiv(R2, tr) < cores and R2 >= cores * _SUBLANE
            and total_bytes >= (2 << 20)):
        tr = _round_up(pl.cdiv(R2, cores), _SUBLANE)

    grid = (pl.cdiv(R2, tr),)
    log2c = max(1, C.bit_length() - 1)
    flops = (6 + 4 * log2c) * rows * C
    bytes_accessed = 2 * rows * C * itemsize + _LANE * itemsize

    out = pl.pallas_call(
        _make_cl_packed_kernel(C),
        out_shape=jax.ShapeDtypeStruct((R2, _LANE), x2.dtype),
        grid_spec=pltpu.PrefetchScalarGridSpec(
            num_scalar_prefetch=0,
            grid=grid,
            in_specs=[
                pl.BlockSpec((tr, _LANE), lambda i: (i, 0)),
                pl.BlockSpec((1, _LANE), lambda i: (0, 0)),       # packed weight
            ],
            out_specs=pl.BlockSpec((tr, _LANE), lambda i: (i, 0)),
        ),
        compiler_params=pltpu.CompilerParams(
            dimension_semantics=("parallel",),
            vmem_limit_bytes=vmem_limit,
        ),
        cost_estimate=pl.CostEstimate(
            flops=flops, transcendentals=rows, bytes_accessed=bytes_accessed),
    )(xp, wp)
    return out.reshape(rows, C)                      # free reshape back


def biasfree_layernorm(x, weight):
    """Drop-in for BiasFree_LayerNorm.forward: x (..., C) -> x / sqrt(var+eps) * w."""
    C = x.shape[-1]
    assert weight.shape == (C,)
    rows = math.prod(x.shape[:-1]) if x.ndim > 1 else 1
    x2 = x.reshape(rows, C)                          # free (row-major)
    if rows > 0 and C <= _LANE and _LANE % C == 0 and rows % (_LANE // C) == 0:
        out2 = _ln_cl_packed_call(x2, weight)        # transpose-free fast path
    else:
        # TODO(synk): direct channels-last kernel for C that does not divide 128
        # (e.g. UHDDIP dims 48/96/192); until then producers should call
        # biasfree_layernorm_nchw / biasfree_layernorm_cf instead of paying the
        # two extra HBM passes of this transpose fallback.
        out2 = biasfree_layernorm_cf(x2.T, weight).T
    return out2.reshape(x.shape)


if __name__ == "__main__":
    key = jax.random.PRNGKey(0)
    kx, kw, kn = jax.random.split(key, 3)

    # 1) Channels-last interface, exactly the PyTorch module: x is (B, HW, C).
    B, N, C = 2, 256, 32
    x = jax.random.normal(kx, (B, N, C), dtype=jnp.float32)
    weight = jnp.ones((C,), dtype=jnp.float32)   # nn.Parameter(torch.ones(C))

    out = jax.block_until_ready(biasfree_layernorm(x, weight))
    var = jnp.var(x, axis=-1, keepdims=True)     # biased (ddof=0), like torch
    ref = x / jnp.sqrt(var + EPS) * weight
    assert out.shape == x.shape
    assert jnp.allclose(out, ref, atol=2e-5, rtol=2e-5), \
        float(jnp.max(jnp.abs(out - ref)))

    # Non-trivial weight to exercise the scale path.
    w2 = jax.random.normal(kw, (C,), dtype=jnp.float32)
    out2 = jax.block_until_ready(biasfree_layernorm(x, w2))
    ref2 = x / jnp.sqrt(var + EPS) * w2
    assert jnp.allclose(out2, ref2, atol=2e-5, rtol=2e-5), \
        float(jnp.max(jnp.abs(out2 - ref2)))

    # 2) NCHW production path (UHDDIP feature maps, Restormer-style C=48):
    #    zero transposes / pads end to end.
    Bn, Cn, H, W = 2, 48, 16, 16
    xn = jax.random.normal(kn, (Bn, Cn, H, W), dtype=jnp.float32)
    wn = jnp.linspace(0.5, 1.5, Cn, dtype=jnp.float32)
    outn = jax.block_until_ready(biasfree_layernorm_nchw(xn, wn))
    varn = jnp.var(xn, axis=1, keepdims=True)
    refn = xn / jnp.sqrt(varn + EPS) * wn.reshape(1, Cn, 1, 1)
    assert outn.shape == xn.shape
    assert jnp.allclose(outn, refn, atol=2e-5, rtol=2e-5), \
        float(jnp.max(jnp.abs(outn - refn)))

    print("KERNEL_OK")
</pallas_src>

<mosaic_0001>
module attributes {stable_mosaic.version = 11 : i64} {
  func.func @kernel(%arg0: i32, %arg1: memref<128x128xf32, #tpu.memory_space<vmem>>, %arg2: memref<1x128xf32, #tpu.memory_space<vmem>>, %arg3: memref<128x128xf32, #tpu.memory_space<vmem>>) attributes {dimension_semantics = [#tpu.dimension_semantics<parallel>], iteration_bounds = array<i64: 1>, scalar_prefetch = 0 : i64, scratch_operands = 0 : i64, tpu.core_type = #tpu.core_type<tc>, window_params = [{transform_indices = @transform_0, window_bounds = array<i64: 128, 128>}, {pipeline_mode = #tpu.pipeline_mode<synchronous>, transform_indices = @transform_1, window_bounds = array<i64: 1, 128>}, {transform_indices = @transform_2, window_bounds = array<i64: 128, 128>}]} {
    %c0 = arith.constant 0 : index
    %c0_0 = arith.constant 0 : index
    %0 = vector.load %arg1[%c0, %c0_0] : memref<128x128xf32, #tpu.memory_space<vmem>>, vector<128x128xf32>
    %1 = tpu.iota {dimensions = array<i32: 1>} : vector<1x128xi32>
    %2 = arith.mulf %0, %0 : vector<128x128xf32>
    %c1_i32 = arith.constant 1 : i32
    %3 = tpu.dynamic_rotate %0 by %c1_i32 dim 1 : vector<128x128xf32>, i32 -> vector<128x128xf32>
    %c127_i32 = arith.constant 127 : i32
    %4 = tpu.dynamic_rotate %0 by %c127_i32 dim 1 : vector<128x128xf32>, i32 -> vector<128x128xf32>
    %c1_i32_1 = arith.constant 1 : i32
    %5 = tpu.dynamic_rotate %2 by %c1_i32_1 dim 1 : vector<128x128xf32>, i32 -> vector<128x128xf32>
    %c127_i32_2 = arith.constant 127 : i32
    %6 = tpu.dynamic_rotate %2 by %c127_i32_2 dim 1 : vector<128x128xf32>, i32 -> vector<128x128xf32>
    %c1_i32_3 = arith.constant 1 : i32
    %7 = tpu.dynamic_rotate %1 by %c1_i32_3 dim 1 : vector<1x128xi32>, i32 -> vector<1x128xi32>
    %c1_i32_4 = arith.constant 1 : i32
    %8 = vector.broadcast %c1_i32_4 : i32 to vector<1x128xi32>
    %9 = arith.xori %1, %8 : vector<1x128xi32>
    %10 = arith.cmpi eq, %7, %9 : vector<1x128xi32>
    %11 = vector.shape_cast %10 : vector<1x128xi1> to vector<1x128xi1>
    %12 = vector.broadcast %11 : vector<1x128xi1> to vector<128x128xi1>
    %13 = arith.select %12, %3, %4 : vector<128x128xi1>, vector<128x128xf32>
    %14 = arith.addf %0, %13 : vector<128x128xf32>
    %15 = vector.shape_cast %10 : vector<1x128xi1> to vector<1x128xi1>
    %16 = vector.broadcast %15 : vector<1x128xi1> to vector<128x128xi1>
    %17 = arith.select %16, %5, %6 : vector<128x128xi1>, vector<128x128xf32>
    %18 = arith.addf %2, %17 : vector<128x128xf32>
    %c2_i32 = arith.constant 2 : i32
    %19 = tpu.dynamic_rotate %14 by %c2_i32 dim 1 : vector<128x128xf32>, i32 -> vector<128x128xf32>
    %c126_i32 = arith.constant 126 : i32
    %20 = tpu.dynamic_rotate %14 by %c126_i32 dim 1 : vector<128x128xf32>, i32 -> vector<128x128xf32>
    %c2_i32_5 = arith.constant 2 : i32
    %21 = tpu.dynamic_rotate %18 by %c2_i32_5 dim 1 : vector<128x128xf32>, i32 -> vector<128x128xf32>
    %c126_i32_6 = arith.constant 126 : i32
    %22 = tpu.dynamic_rotate %18 by %c126_i32_6 dim 1 : vector<128x128xf32>, i32 -> vector<128x128xf32>
    %c2_i32_7 = arith.constant 2 : i32
    %23 = tpu.dynamic_rotate %1 by %c2_i32_7 dim 1 : vector<1x128xi32>, i32 -> vector<1x128xi32>
    %c2_i32_8 = arith.constant 2 : i32
    %24 = vector.broadcast %c2_i32_8 : i32 to vector<1x128xi32>
    %25 = arith.xori %1, %24 : vector<1x128xi32>
    %26 = arith.cmpi eq, %23, %25 : vector<1x128xi32>
    %27 = vector.shape_cast %26 : vector<1x128xi1> to vector<1x128xi1>
    %28 = vector.broadcast %27 : vector<1x128xi1> to vector<128x128xi1>
    %29 = arith.select %28, %19, %20 : vector<128x128xi1>, vector<128x128xf32>
    %30 = arith.addf %14, %29 : vector<128x128xf32>
    %31 = vector.shape_cast %26 : vector<1x128xi1> to vector<1x128xi1>
    %32 = vector.broadcast %31 : vector<1x128xi1> to vector<128x128xi1>
    %33 = arith.select %32, %21, %22 : vector<128x128xi1>, vector<128x128xf32>
    %34 = arith.addf %18, %33 : vector<128x128xf32>
    %c4_i32 = arith.constant 4 : i32
    %35 = tpu.dynamic_rotate %30 by %c4_i32 dim 1 : vector<128x128xf32>, i32 -> vector<128x128xf32>
    %c124_i32 = arith.constant 124 : i32
    %36 = tpu.dynamic_rotate %30 by %c124_i32 dim 1 : vector<128x128xf32>, i32 -> vector<128x128xf32>
    %c4_i32_9 = arith.constant 4 : i32
    %37 = tpu.dynamic_rotate %34 by %c4_i32_9 dim 1 : vector<128x128xf32>, i32 -> vector<128x128xf32>
    %c124_i32_10 = arith.constant 124 : i32
    %38 = tpu.dynamic_rotate %34 by %c124_i32_10 dim 1 : vector<128x128xf32>, i32 -> vector<128x128xf32>
    %c4_i32_11 = arith.constant 4 : i32
    %39 = tpu.dynamic_rotate %1 by %c4_i32_11 dim 1 : vector<1x128xi32>, i32 -> vector<1x128xi32>
    %c4_i32_12 = arith.constant 4 : i32
    %40 = vector.broadcast %c4_i32_12 : i32 to vector<1x128xi32>
    %41 = arith.xori %1, %40 : vector<1x128xi32>
    %42 = arith.cmpi eq, %39, %41 : vector<1x128xi32>
    %43 = vector.shape_cast %42 : vector<1x128xi1> to vector<1x128xi1>
    %44 = vector.broadcast %43 : vector<1x128xi1> to vector<128x128xi1>
    %45 = arith.select %44, %35, %36 : vector<128x128xi1>, vector<128x128xf32>
    %46 = arith.addf %30, %45 : vector<128x128xf32>
    %47 = vector.shape_cast %42 : vector<1x128xi1> to vector<1x128xi1>
    %48 = vector.broadcast %47 : vector<1x128xi1> to vector<128x128xi1>
    %49 = arith.select %48, %37, %38 : vector<128x128xi1>, vector<128x128xf32>
    %50 = arith.addf %34, %49 : vector<128x128xf32>
    %c8_i32 = arith.constant 8 : i32
    %51 = tpu.dynamic_rotate %46 by %c8_i32 dim 1 : vector<128x128xf32>, i32 -> vector<128x128xf32>
    %c120_i32 = arith.constant 120 : i32
    %52 = tpu.dynamic_rotate %46 by %c120_i32 dim 1 : vector<128x128xf32>, i32 -> vector<128x128xf32>
    %c8_i32_13 = arith.constant 8 : i32
    %53 = tpu.dynamic_rotate %50 by %c8_i32_13 dim 1 : vector<128x128xf32>, i32 -> vector<128x128xf32>
    %c120_i32_14 = arith.constant 120 : i32
    %54 = tpu.dynamic_rotate %50 by %c120_i32_14 dim 1 : vector<128x128xf32>, i32 -> vector<128x128xf32>
    %c8_i32_15 = arith.constant 8 : i32
    %55 = tpu.dynamic_rotate %1 by %c8_i32_15 dim 1 : vector<1x128xi32>, i32 -> vector<1x128xi32>
    %c8_i32_16 = arith.constant 8 : i32
    %56 = vector.broadcast %c8_i32_16 : i32 to vector<1x128xi32>
    %57 = arith.xori %1, %56 : vector<1x128xi32>
    %58 = arith.cmpi eq, %55, %57 : vector<1x128xi32>
    %59 = vector.shape_cast %58 : vector<1x128xi1> to vector<1x128xi1>
    %60 = vector.broadcast %59 : vector<1x128xi1> to vector<128x128xi1>
    %61 = arith.select %60, %51, %52 : vector<128x128xi1>, vector<128x128xf32>
    %62 = arith.addf %46, %61 : vector<128x128xf32>
    %63 = vector.shape_cast %58 : vector<1x128xi1> to vector<1x128xi1>
    %64 = vector.broadcast %63 : vector<1x128xi1> to vector<128x128xi1>
    %65 = arith.select %64, %53, %54 : vector<128x128xi1>, vector<128x128xf32>
    %66 = arith.addf %50, %65 : vector<128x128xf32>
    %c16_i32 = arith.constant 16 : i32
    %67 = tpu.dynamic_rotate %62 by %c16_i32 dim 1 : vector<128x128xf32>, i32 -> vector<128x128xf32>
    %c112_i32 = arith.constant 112 : i32
    %68 = tpu.dynamic_rotate %62 by %c112_i32 dim 1 : vector<128x128xf32>, i32 -> vector<128x128xf32>
    %c16_i32_17 = arith.constant 16 : i32
    %69 = tpu.dynamic_rotate %66 by %c16_i32_17 dim 1 : vector<128x128xf32>, i32 -> vector<128x128xf32>
    %c112_i32_18 = arith.constant 112 : i32
    %70 = tpu.dynamic_rotate %66 by %c112_i32_18 dim 1 : vector<128x128xf32>, i32 -> vector<128x128xf32>
    %c16_i32_19 = arith.constant 16 : i32
    %71 = tpu.dynamic_rotate %1 by %c16_i32_19 dim 1 : vector<1x128xi32>, i32 -> vector<1x128xi32>
    %c16_i32_20 = arith.constant 16 : i32
    %72 = vector.broadcast %c16_i32_20 : i32 to vector<1x128xi32>
    %73 = arith.xori %1, %72 : vector<1x128xi32>
    %74 = arith.cmpi eq, %71, %73 : vector<1x128xi32>
    %75 = vector.shape_cast %74 : vector<1x128xi1> to vector<1x128xi1>
    %76 = vector.broadcast %75 : vector<1x128xi1> to vector<128x128xi1>
    %77 = arith.select %76, %67, %68 : vector<128x128xi1>, vector<128x128xf32>
    %78 = arith.addf %62, %77 : vector<128x128xf32>
    %79 = vector.shape_cast %74 : vector<1x128xi1> to vector<1x128xi1>
    %80 = vector.broadcast %79 : vector<1x128xi1> to vector<128x128xi1>
    %81 = arith.select %80, %69, %70 : vector<128x128xi1>, vector<128x128xf32>
    %82 = arith.addf %66, %81 : vector<128x128xf32>
    %cst = arith.constant 3.125000e-02 : f32
    %83 = vector.broadcast %cst : f32 to vector<128x128xf32>
    %84 = arith.mulf %78, %83 : vector<128x128xf32>
    %cst_21 = arith.constant 3.125000e-02 : f32
    %85 = vector.broadcast %cst_21 : f32 to vector<128x128xf32>
    %86 = arith.mulf %82, %85 : vector<128x128xf32>
    %87 = arith.mulf %84, %84 : vector<128x128xf32>
    %88 = arith.subf %86, %87 : vector<128x128xf32>
    %cst_22 = arith.constant 0.000000e+00 : f32
    %89 = vector.broadcast %cst_22 : f32 to vector<128x128xf32>
    %90 = arith.maximumf %88, %89 : vector<128x128xf32>
    %cst_23 = arith.constant 9.99999974E-6 : f32
    %91 = vector.broadcast %cst_23 : f32 to vector<128x128xf32>
    %92 = arith.addf %90, %91 : vector<128x128xf32>
    %93 = math.rsqrt %92 : vector<128x128xf32>
    %c0_24 = arith.constant 0 : index
    %c0_25 = arith.constant 0 : index
    %94 = vector.load %arg2[%c0_24, %c0_25] : memref<1x128xf32, #tpu.memory_space<vmem>>, vector<1x128xf32>
    %95 = arith.mulf %0, %93 : vector<128x128xf32>
    %96 = vector.broadcast %94 : vector<1x128xf32> to vector<128x128xf32>
    %97 = arith.mulf %95, %96 : vector<128x128xf32>
    %c0_26 = arith.constant 0 : index
    %c0_27 = arith.constant 0 : index
    %98 = vector.load %arg3[%c0_26, %c0_27] : memref<128x128xf32, #tpu.memory_space<vmem>>, vector<128x128xf32>
    tpu.vector_store %arg3[%c0_26, %c0_27], %97 {strides = array<i32>} : memref<128x128xf32, #tpu.memory_space<vmem>>, vector<128x128xf32>,
    return
  }
  func.func @transform_0(%arg0: i32) -> (i32, i32) {
    %c0_i32 = arith.constant 0 : i32
    %c0_i32_0 = arith.constant 0 : i32
    return %arg0, %c0_i32 : i32, i32
  }
  func.func @transform_1(%arg0: i32) -> (i32, i32) {
    %c0_i32 = arith.constant 0 : i32
    %c0_i32_0 = arith.constant 0 : i32
    %c0_i32_1 = arith.constant 0 : i32
    return %c0_i32, %c0_i32_0 : i32, i32
  }
  func.func @transform_2(%arg0: i32) -> (i32, i32) {
    %c0_i32 = arith.constant 0 : i32
    %c0_i32_0 = arith.constant 0 : i32
    return %arg0, %c0_i32 : i32, i32
  }
}

</mosaic_0001>

<llo_original>
// kernel: tpu_custom_call.1
$region0: #{tpu_custom_call.1}
  #allocation0 [shape = 'u32[]', space=smem, size = 0x4, offset = 0x4, fixed_abs, tag = 'smem constant byte address 0x4 - core index']
  #allocation1 [shape = 'u32[72,128]{1,0:T(1,128)}', space=vmem, size = 0x9000, scoped, tag = 'internal scratch']
  %s0 = inlined_call_operand.hbm [shape: f32[128,128], index: 0, kind: input, shape index: {}]
  %s1 = inlined_call_operand.hbm [shape: f32[1,128], index: 1, kind: input, shape index: {}]
  %s2 = inlined_call_operand.hbm [shape: f32[128,128], index: 2, kind: output, shape index: {}]
  %s3 = sld [smem:[#allocation0]]
  $region26: #{tpu_custom_call.1} parent=0
    _
  %s5 = ssub.s32 1, %s3
  %s6 = scalar_select 0, %s5, %s3
  $region1: #{tpu_custom_call.1} parent=0
    #allocation2 [shape = 'u8[65536]{0}', space=vmem, size = 0x10000, scoped, tag = 'input window, operand 0, single buffered']
    #allocation3 [shape = 's32[1]{0}', space=sflag, size = 0x4, scoped, tag = 'scoped memory for tpu_custom_call.1']
    #allocation4 [shape = 's32[1]{0}', space=sflag, size = 0x4, scoped, tag = 'scoped memory for tpu_custom_call.1']
    #allocation5 [shape = 'u8[512]{0}', space=vmem, size = 0x400, scoped, tag = 'input window, operand 1, single buffered']
    #allocation6 [shape = 's32[1]{0}', space=sflag, size = 0x4, scoped, tag = 'scoped memory for tpu_custom_call.1']
    #allocation7 [shape = 'u8[65536]{0}', space=vmem, size = 0x10000, scoped, tag = 'output window, operand 0, single buffered']
    %7 = vsyncpa [#allocation3], 0
    %8 = vsyncpa [#allocation6], 0
    %9 = vsyncpa [#allocation4], 0
    // Predicated region
    $region2: #{tpu_custom_call.1} parent=1 // pred_check
      _
    $region3: #{tpu_custom_call.1} parent=1 // pred_check_branch
      %11 = sbr.rel (0) target = $region5
    $region4: #{tpu_custom_call.1} parent=1 // pred_region
      %13 = vsyncadd [#allocation3], 0
      %s14 = sshll.u32 %s0, 4
      %s15 = int_to_ptr.hbm [resolvable:$true] %s14
      %s16 = sshll.u32 [#allocation2], 4
      %s17 = int_to_ptr.vmem [resolvable:$true] %s16
      %22 = dma.hbm_to_vmem [thread:$0]  %s15, 2048, %s17, [#allocation3], 128, 128, 8
    $region5: #{tpu_custom_call.1} parent=1 // pred_fallthru
      _
    // Predicated region
    $region6: #{tpu_custom_call.1} parent=1 // pred_check
      _
    $region7: #{tpu_custom_call.1} parent=1 // pred_check_branch
      %24 = sbr.rel (0) target = $region9
    $region8: #{tpu_custom_call.1} parent=1 // pred_region
      %26 = vsyncadd [#allocation6], 0
      %s28 = sshll.u32 %s1, 4
      %s29 = int_to_ptr.hbm [resolvable:$true] %s28
      %s30 = sshll.u32 [#allocation5], 4
      %s31 = int_to_ptr.vmem [resolvable:$true] %s30
      %33 = dma.hbm_to_vmem [thread:$0]  %s29, 16, %s31, [#allocation6]
    $region9: #{tpu_custom_call.1} parent=1 // pred_fallthru
      _
    // Predicated region
    $region10: #{tpu_custom_call.1} parent=1 // pred_check
      _
    $region11: #{tpu_custom_call.1} parent=1 // pred_check_branch
      %35 = sbr.rel (0) target = $region13
    $region12: #{tpu_custom_call.1} parent=1 // pred_region
      %37 = dma.done [#allocation3], 2048
    $region13: #{tpu_custom_call.1} parent=1 // pred_fallthru
      _
    // Predicated region
    $region14: #{tpu_custom_call.1} parent=1 // pred_check
      _
    $region15: #{tpu_custom_call.1} parent=1 // pred_check_branch
      %39 = sbr.rel (0) target = $region17
    $region16: #{tpu_custom_call.1} parent=1 // pred_region
      %41 = dma.done [#allocation6], 16
    $region17: #{tpu_custom_call.1} parent=1 // pred_fallthru
      _
    %v42 = vld [vmem:[#allocation2] sm:$0xff]
    %v43 = vld [vmem:[#allocation2 + $0x8] sm:$0xff]
    %v44 = vld [vmem:[#allocation2 + $0x10] sm:$0xff]
    %v45 = vld [vmem:[#allocation2 + $0x18] sm:$0xff]
    %v46 = vld [vmem:[#allocation2 + $0x20] sm:$0xff]
    %v47 = vld [vmem:[#allocation2 + $0x28] sm:$0xff]
    %v48 = vld [vmem:[#allocation2 + $0x30] sm:$0xff]
    %v49 = vld [vmem:[#allocation2 + $0x38] sm:$0xff]
    %v50 = vld [vmem:[#allocation2 + $0x40] sm:$0xff]
    %v51 = vld [vmem:[#allocation2 + $0x48] sm:$0xff]
    %v52 = vld [vmem:[#allocation2 + $0x50] sm:$0xff]
    %v53 = vld [vmem:[#allocation2 + $0x58] sm:$0xff]
    %v54 = vld [vmem:[#allocation2 + $0x60] sm:$0xff]
    %v55 = vld [vmem:[#allocation2 + $0x68] sm:$0xff]
    %v56 = vld [vmem:[#allocation2 + $0x70] sm:$0xff]
    %v57 = vld [vmem:[#allocation2 + $0x78] sm:$0xff]
    %v58 = vlaneseq
    %v59 = vand.u32 %v58, 127
    %v60 = vmul.f32 %v42, %v42
    %v61 = vmul.f32 %v43, %v43
    %v62 = vmul.f32 %v44, %v44
    %v63 = vmul.f32 %v45, %v45
    %v64 = vmul.f32 %v46, %v46
    %v65 = vmul.f32 %v47, %v47
    %v66 = vmul.f32 %v48, %v48
    %v67 = vmul.f32 %v49, %v49
    %v68 = vmul.f32 %v50, %v50
    %v69 = vmul.f32 %v51, %v51
    %v70 = vmul.f32 %v52, %v52
    %v71 = vmul.f32 %v53, %v53
    %v72 = vmul.f32 %v54, %v54
    %v73 = vmul.f32 %v55, %v55
    %v74 = vmul.f32 %v56, %v56
    %v75 = vmul.f32 %v57, %v57
    %76 = vrot.lane.b32.xlu0 %v42, 1
    %v77 = vpop.permute.xlu0 %76
    %78 = vrot.lane.b32.xlu0 %v43, 1
    %v79 = vpop.permute.xlu0 %78
    %80 = vrot.lane.b32.xlu0 %v44, 1
    %v81 = vpop.permute.xlu0 %80
    %82 = vrot.lane.b32.xlu0 %v45, 1
    %v83 = vpop.permute.xlu0 %82
    %84 = vrot.lane.b32.xlu0 %v46, 1
    %v85 = vpop.permute.xlu0 %84
    %86 = vrot.lane.b32.xlu0 %v47, 1
    %v87 = vpop.permute.xlu0 %86
    %88 = vrot.lane.b32.xlu0 %v48, 1
    %v89 = vpop.permute.xlu0 %88
    %90 = vrot.lane.b32.xlu0 %v49, 1
    %v91 = vpop.permute.xlu0 %90
    %92 = vrot.lane.b32.xlu0 %v50, 1
    %v93 = vpop.permute.xlu0 %92
    %94 = vrot.lane.b32.xlu0 %v51, 1
    %v95 = vpop.permute.xlu0 %94
    %96 = vrot.lane.b32.xlu0 %v52, 1
    %v97 = vpop.permute.xlu0 %96
    %98 = vrot.lane.b32.xlu0 %v53, 1
    %v99 = vpop.permute.xlu0 %98
    %100 = vrot.lane.b32.xlu0 %v54, 1
    %v101 = vpop.permute.xlu0 %100
    %102 = vrot.lane.b32.xlu0 %v55, 1
    %v103 = vpop.permute.xlu0 %102
    %104 = vrot.lane.b32.xlu0 %v56, 1
    %v105 = vpop.permute.xlu0 %104
    %106 = vrot.lane.b32.xlu0 %v57, 1
    %v107 = vpop.permute.xlu0 %106
    %108 = vrot.lane.b32.xlu0 %v42, 127
    %v109 = vpop.permute.xlu0 %108
    %110 = vrot.lane.b32.xlu0 %v43, 127
    %v111 = vpop.permute.xlu0 %110
    %112 = vrot.lane.b32.xlu0 %v44, 127
    %v113 = vpop.permute.xlu0 %112
    %114 = vrot.lane.b32.xlu0 %v45, 127
    %v115 = vpop.permute.xlu0 %114
    %116 = vrot.lane.b32.xlu0 %v46, 127
    %v117 = vpop.permute.xlu0 %116
    %118 = vrot.lane.b32.xlu0 %v47, 127
    %v119 = vpop.permute.xlu0 %118
    %120 = vrot.lane.b32.xlu0 %v48, 127
    %v121 = vpop.permute.xlu0 %120
    %122 = vrot.lane.b32.xlu0 %v49, 127
    %v123 = vpop.permute.xlu0 %122
    %124 = vrot.lane.b32.xlu0 %v50, 127
    %v125 = vpop.permute.xlu0 %124
    %126 = vrot.lane.b32.xlu0 %v51, 127
    %v127 = vpop.permute.xlu0 %126
    %128 = vrot.lane.b32.xlu0 %v52, 127
    %v129 = vpop.permute.xlu0 %128
    %130 = vrot.lane.b32.xlu0 %v53, 127
    %v131 = vpop.permute.xlu0 %130
    %132 = vrot.lane.b32.xlu0 %v54, 127
    %v133 = vpop.permute.xlu0 %132
    %134 = vrot.lane.b32.xlu0 %v55, 127
    %v135 = vpop.permute.xlu0 %134
    %136 = vrot.lane.b32.xlu0 %v56, 127
    %v137 = vpop.permute.xlu0 %136
    %138 = vrot.lane.b32.xlu0 %v57, 127
    %v139 = vpop.permute.xlu0 %138
    %140 = vrot.lane.b32.xlu0 %v60, 1
    %v141 = vpop.permute.xlu0 %140
    %142 = vrot.lane.b32.xlu0 %v61, 1
    %v143 = vpop.permute.xlu0 %142
    %144 = vrot.lane.b32.xlu0 %v62, 1
    %v145 = vpop.permute.xlu0 %144
    %146 = vrot.lane.b32.xlu0 %v63, 1
    %v147 = vpop.permute.xlu0 %146
    %148 = vrot.lane.b32.xlu0 %v64, 1
    %v149 = vpop.permute.xlu0 %148
    %150 = vrot.lane.b32.xlu0 %v65, 1
    %v151 = vpop.permute.xlu0 %150
    %152 = vrot.lane.b32.xlu0 %v66, 1
    %v153 = vpop.permute.xlu0 %152
    %154 = vrot.lane.b32.xlu0 %v67, 1
    %v155 = vpop.permute.xlu0 %154
    %156 = vrot.lane.b32.xlu0 %v68, 1
    %v157 = vpop.permute.xlu0 %156
    %158 = vrot.lane.b32.xlu0 %v69, 1
    %v159 = vpop.permute.xlu0 %158
    %160 = vrot.lane.b32.xlu0 %v70, 1
    %v161 = vpop.permute.xlu0 %160
    %162 = vrot.lane.b32.xlu0 %v71, 1
    %v163 = vpop.permute.xlu0 %162
    %164 = vrot.lane.b32.xlu0 %v72, 1
    %v165 = vpop.permute.xlu0 %164
    %166 = vrot.lane.b32.xlu0 %v73, 1
    %v167 = vpop.permute.xlu0 %166
    %168 = vrot.lane.b32.xlu0 %v74, 1
    %v169 = vpop.permute.xlu0 %168
    %170 = vrot.lane.b32.xlu0 %v75, 1
    %v171 = vpop.permute.xlu0 %170
    %172 = vrot.lane.b32.xlu0 %v60, 127
    %v173 = vpop.permute.xlu0 %172
    %174 = vrot.lane.b32.xlu0 %v61, 127
    %v175 = vpop.permute.xlu0 %174
    %176 = vrot.lane.b32.xlu0 %v62, 127
    %v177 = vpop.permute.xlu0 %176
    %178 = vrot.lane.b32.xlu0 %v63, 127
    %v179 = vpop.permute.xlu0 %178
    %180 = vrot.lane.b32.xlu0 %v64, 127
    %v181 = vpop.permute.xlu0 %180
    %182 = vrot.lane.b32.xlu0 %v65, 127
    %v183 = vpop.permute.xlu0 %182
    %184 = vrot.lane.b32.xlu0 %v66, 127
    %v185 = vpop.permute.xlu0 %184
    %186 = vrot.lane.b32.xlu0 %v67, 127
    %v187 = vpop.permute.xlu0 %186
    %188 = vrot.lane.b32.xlu0 %v68, 127
    %v189 = vpop.permute.xlu0 %188
    %190 = vrot.lane.b32.xlu0 %v69, 127
    %v191 = vpop.permute.xlu0 %190
    %192 = vrot.lane.b32.xlu0 %v70, 127
    %v193 = vpop.permute.xlu0 %192
    %194 = vrot.lane.b32.xlu0 %v71, 127
    %v195 = vpop.permute.xlu0 %194
    %196 = vrot.lane.b32.xlu0 %v72, 127
    %v197 = vpop.permute.xlu0 %196
    %198 = vrot.lane.b32.xlu0 %v73, 127
    %v199 = vpop.permute.xlu0 %198
    %200 = vrot.lane.b32.xlu0 %v74, 127
    %v201 = vpop.permute.xlu0 %200
    %202 = vrot.lane.b32.xlu0 %v75, 127
    %v203 = vpop.permute.xlu0 %202
    %204 = vrot.lane.b32.xlu0 %v59, 1
    %v205 = vpop.permute.xlu0 %204
    %v206 = vxor.u32 %v59, 1
    %vm207 = vcmp.eq.s32.totalorder %v205, %v206
    %v208 = vsel %vm207, 1, 0
    %v209 = vperm.slane %v208, 0
    %vm210 = vcmp.eq.s32.totalorder %v209, 1
    %v211 = vsel %vm210, %v77, %v109
    %v212 = vsel %vm210, %v79, %v111
    %v213 = vsel %vm210, %v81, %v113
    %v214 = vsel %vm210, %v83, %v115
    %v215 = vsel %vm210, %v85, %v117
    %v216 = vsel %vm210, %v87, %v119
    %v217 = vsel %vm210, %v89, %v121
    %v218 = vsel %vm210, %v91, %v123
    %v219 = vsel %vm210, %v93, %v125
    %v220 = vsel %vm210, %v95, %v127
    %v221 = vsel %vm210, %v97, %v129
    %v222 = vsel %vm210, %v99, %v131
    %v223 = vsel %vm210, %v101, %v133
    %v224 = vsel %vm210, %v103, %v135
    %v225 = vsel %vm210, %v105, %v137
    %v226 = vsel %vm210, %v107, %v139
    %v227 = vadd.f32 %v42, %v211
    %v228 = vadd.f32 %v43, %v212
    %v229 = vadd.f32 %v44, %v213
    %v230 = vadd.f32 %v45, %v214
    %v231 = vadd.f32 %v46, %v215
    %v232 = vadd.f32 %v47, %v216
    %v233 = vadd.f32 %v48, %v217
    %v234 = vadd.f32 %v49, %v218
    %v235 = vadd.f32 %v50, %v219
    %v236 = vadd.f32 %v51, %v220
    %v237 = vadd.f32 %v52, %v221
    %v238 = vadd.f32 %v53, %v222
    %v239 = vadd.f32 %v54, %v223
    %v240 = vadd.f32 %v55, %v224
    %v241 = vadd.f32 %v56, %v225
    %v242 = vadd.f32 %v57, %v226
    %v243 = vsel %vm210, %v141, %v173
    %v244 = vsel %vm210, %v143, %v175
    %v245 = vsel %vm210, %v145, %v177
    %v246 = vsel %vm210, %v147, %v179
    %v247 = vsel %vm210, %v149, %v181
    %v248 = vsel %vm210, %v151, %v183
    %v249 = vsel %vm210, %v153, %v185
    %v250 = vsel %vm210, %v155, %v187
    %v251 = vsel %vm210, %v157, %v189
    %v252 = vsel %vm210, %v159, %v191
    %v253 = vsel %vm210, %v161, %v193
    %v254 = vsel %vm210, %v163, %v195
    %v255 = vsel %vm210, %v165, %v197
    %v256 = vsel %vm210, %v167, %v199
    %v257 = vsel %vm210, %v169, %v201
    %v258 = vsel %vm210, %v171, %v203
    %v259 = vadd.f32 %v60, %v243
    %v260 = vadd.f32 %v61, %v244
    %v261 = vadd.f32 %v62, %v245
    %v262 = vadd.f32 %v63, %v246
    %v263 = vadd.f32 %v64, %v247
    %v264 = vadd.f32 %v65, %v248
    %v265 = vadd.f32 %v66, %v249
    %v266 = vadd.f32 %v67, %v250
    %v267 = vadd.f32 %v68, %v251
    %v268 = vadd.f32 %v69, %v252
    %v269 = vadd.f32 %v70, %v253
    %v270 = vadd.f32 %v71, %v254
    %v271 = vadd.f32 %v72, %v255
    %v272 = vadd.f32 %v73, %v256
    %v273 = vadd.f32 %v74, %v257
    %v274 = vadd.f32 %v75, %v258
    %275 = vrot.lane.b32.xlu0 %v227, 2
    %v276 = vpop.permute.xlu0 %275
    %277 = vrot.lane.b32.xlu0 %v228, 2
    %v278 = vpop.permute.xlu0 %277
    %279 = vrot.lane.b32.xlu0 %v229, 2
    %v280 = vpop.permute.xlu0 %279
    %281 = vrot.lane.b32.xlu0 %v230, 2
    %v282 = vpop.permute.xlu0 %281
    %283 = vrot.lane.b32.xlu0 %v231, 2
    %v284 = vpop.permute.xlu0 %283
    %285 = vrot.lane.b32.xlu0 %v232, 2
    %v286 = vpop.permute.xlu0 %285
    %287 = vrot.lane.b32.xlu0 %v233, 2
    %v288 = vpop.permute.xlu0 %287
    %289 = vrot.lane.b32.xlu0 %v234, 2
    %v290 = vpop.permute.xlu0 %289
    %291 = vrot.lane.b32.xlu0 %v235, 2
    %v292 = vpop.permute.xlu0 %291
    %293 = vrot.lane.b32.xlu0 %v236, 2
    %v294 = vpop.permute.xlu0 %293
    %295 = vrot.lane.b32.xlu0 %v237, 2
    %v296 = vpop.permute.xlu0 %295
    %297 = vrot.lane.b32.xlu0 %v238, 2
    %v298 = vpop.permute.xlu0 %297
    %299 = vrot.lane.b32.xlu0 %v239, 2
    %v300 = vpop.permute.xlu0 %299
    %301 = vrot.lane.b32.xlu0 %v240, 2
    %v302 = vpop.permute.xlu0 %301
    %303 = vrot.lane.b32.xlu0 %v241, 2
    %v304 = vpop.permute.xlu0 %303
    %305 = vrot.lane.b32.xlu0 %v242, 2
    %v306 = vpop.permute.xlu0 %305
    %307 = vrot.lane.b32.xlu0 %v227, 126
    %v308 = vpop.permute.xlu0 %307
    %309 = vrot.lane.b32.xlu0 %v228, 126
    %v310 = vpop.permute.xlu0 %309
    %311 = vrot.lane.b32.xlu0 %v229, 126
    %v312 = vpop.permute.xlu0 %311
    %313 = vrot.lane.b32.xlu0 %v230, 126
    %v314 = vpop.permute.xlu0 %313
    %315 = vrot.lane.b32.xlu0 %v231, 126
    %v316 = vpop.permute.xlu0 %315
    %317 = vrot.lane.b32.xlu0 %v232, 126
    %v318 = vpop.permute.xlu0 %317
    %319 = vrot.lane.b32.xlu0 %v233, 126
    %v320 = vpop.permute.xlu0 %319
    %321 = vrot.lane.b32.xlu0 %v234, 126
    %v322 = vpop.permute.xlu0 %321
    %323 = vrot.lane.b32.xlu0 %v235, 126
    %v324 = vpop.permute.xlu0 %323
    %325 = vrot.lane.b32.xlu0 %v236, 126
    %v326 = vpop.permute.xlu0 %325
    %327 = vrot.lane.b32.xlu0 %v237, 126
    %v328 = vpop.permute.xlu0 %327
    %329 = vrot.lane.b32.xlu0 %v238, 126
    %v330 = vpop.permute.xlu0 %329
    %331 = vrot.lane.b32.xlu0 %v239, 126
    %v332 = vpop.permute.xlu0 %331
    %333 = vrot.lane.b32.xlu0 %v240, 126
    %v334 = vpop.permute.xlu0 %333
    %335 = vrot.lane.b32.xlu0 %v241, 126
    %v336 = vpop.permute.xlu0 %335
    %337 = vrot.lane.b32.xlu0 %v242, 126
    %v338 = vpop.permute.xlu0 %337
    %339 = vrot.lane.b32.xlu0 %v259, 2
    %v340 = vpop.permute.xlu0 %339
    %341 = vrot.lane.b32.xlu0 %v260, 2
    %v342 = vpop.permute.xlu0 %341
    %343 = vrot.lane.b32.xlu0 %v261, 2
    %v344 = vpop.permute.xlu0 %343
    %345 = vrot.lane.b32.xlu0 %v262, 2
    %v346 = vpop.permute.xlu0 %345
    %347 = vrot.lane.b32.xlu0 %v263, 2
    %v348 = vpop.permute.xlu0 %347
    %349 = vrot.lane.b32.xlu0 %v264, 2
    %v350 = vpop.permute.xlu0 %349
    %351 = vrot.lane.b32.xlu0 %v265, 2
    %v352 = vpop.permute.xlu0 %351
    %353 = vrot.lane.b32.xlu0 %v266, 2
    %v354 = vpop.permute.xlu0 %353
    %355 = vrot.lane.b32.xlu0 %v267, 2
    %v356 = vpop.permute.xlu0 %355
    %357 = vrot.lane.b32.xlu0 %v268, 2
    %v358 = vpop.permute.xlu0 %357
    %359 = vrot.lane.b32.xlu0 %v269, 2
    %v360 = vpop.permute.xlu0 %359
    %361 = vrot.lane.b32.xlu0 %v270, 2
    %v362 = vpop.permute.xlu0 %361
    %363 = vrot.lane.b32.xlu0 %v271, 2
    %v364 = vpop.permute.xlu0 %363
    %365 = vrot.lane.b32.xlu0 %v272, 2
    %v366 = vpop.permute.xlu0 %365
    %367 = vrot.lane.b32.xlu0 %v273, 2
    %v368 = vpop.permute.xlu0 %367
    %369 = vrot.lane.b32.xlu0 %v274, 2
    %v370 = vpop.permute.xlu0 %369
    %371 = vrot.lane.b32.xlu0 %v259, 126
    %v372 = vpop.permute.xlu0 %371
    %373 = vrot.lane.b32.xlu0 %v260, 126
    %v374 = vpop.permute.xlu0 %373
    %375 = vrot.lane.b32.xlu0 %v261, 126
    %v376 = vpop.permute.xlu0 %375
    %377 = vrot.lane.b32.xlu0 %v262, 126
    %v378 = vpop.permute.xlu0 %377
    %379 = vrot.lane.b32.xlu0 %v263, 126
    %v380 = vpop.permute.xlu0 %379
    %381 = vrot.lane.b32.xlu0 %v264, 126
    %v382 = vpop.permute.xlu0 %381
    %383 = vrot.lane.b32.xlu0 %v265, 126
    %v384 = vpop.permute.xlu0 %383
    %385 = vrot.lane.b32.xlu0 %v266, 126
    %v386 = vpop.permute.xlu0 %385
    %387 = vrot.lane.b32.xlu0 %v267, 126
    %v388 = vpop.permute.xlu0 %387
    %389 = vrot.lane.b32.xlu0 %v268, 126
    %v390 = vpop.permute.xlu0 %389
    %391 = vrot.lane.b32.xlu0 %v269, 126
    %v392 = vpop.permute.xlu0 %391
    %393 = vrot.lane.b32.xlu0 %v270, 126
    %v394 = vpop.permute.xlu0 %393
    %395 = vrot.lane.b32.xlu0 %v271, 126
    %v396 = vpop.permute.xlu0 %395
    %397 = vrot.lane.b32.xlu0 %v272, 126
    %v398 = vpop.permute.xlu0 %397
    %399 = vrot.lane.b32.xlu0 %v273, 126
    %v400 = vpop.permute.xlu0 %399
    %401 = vrot.lane.b32.xlu0 %v274, 126
    %v402 = vpop.permute.xlu0 %401
    %403 = vrot.lane.b32.xlu0 %v59, 2
    %v404 = vpop.permute.xlu0 %403
    %v405 = vxor.u32 %v59, 2
    %vm406 = vcmp.eq.s32.totalorder %v404, %v405
    %v407 = vsel %vm406, 1, 0
    %v408 = vperm.slane %v407, 0
    %vm409 = vcmp.eq.s32.totalorder %v408, 1
    %v410 = vsel %vm409, %v276, %v308
    %v411 = vsel %vm409, %v278, %v310
    %v412 = vsel %vm409, %v280, %v312
    %v413 = vsel %vm409, %v282, %v314
    %v414 = vsel %vm409, %v284, %v316
    %v415 = vsel %vm409, %v286, %v318
    %v416 = vsel %vm409, %v288, %v320
    %v417 = vsel %vm409, %v290, %v322
    %v418 = vsel %vm409, %v292, %v324
    %v419 = vsel %vm409, %v294, %v326
    %v420 = vsel %vm409, %v296, %v328
    %v421 = vsel %vm409, %v298, %v330
    %v422 = vsel %vm409, %v300, %v332
    %v423 = vsel %vm409, %v302, %v334
    %v424 = vsel %vm409, %v304, %v336
    %v425 = vsel %vm409, %v306, %v338
    %v426 = vadd.f32 %v227, %v410
    %v427 = vadd.f32 %v228, %v411
    %v428 = vadd.f32 %v229, %v412
    %v429 = vadd.f32 %v230, %v413
    %v430 = vadd.f32 %v231, %v414
    %v431 = vadd.f32 %v232, %v415
    %v432 = vadd.f32 %v233, %v416
    %v433 = vadd.f32 %v234, %v417
    %v434 = vadd.f32 %v235, %v418
    %v435 = vadd.f32 %v236, %v419
    %v436 = vadd.f32 %v237, %v420
    %v437 = vadd.f32 %v238, %v421
    %v438 = vadd.f32 %v239, %v422
    %v439 = vadd.f32 %v240, %v423
    %v440 = vadd.f32 %v241, %v424
    %v441 = vadd.f32 %v242, %v425
    %v442 = vsel %vm409, %v340, %v372
    %v443 = vsel %vm409, %v342, %v374
    %v444 = vsel %vm409, %v344, %v376
    %v445 = vsel %vm409, %v346, %v378
    %v446 = vsel %vm409, %v348, %v380
    %v447 = vsel %vm409, %v350, %v382
    %v448 = vsel %vm409, %v352, %v384
    %v449 = vsel %vm409, %v354, %v386
    %v450 = vsel %vm409, %v356, %v388
    %v451 = vsel %vm409, %v358, %v390
    %v452 = vsel %vm409, %v360, %v392
    %v453 = vsel %vm409, %v362, %v394
    %v454 = vsel %vm409, %v364, %v396
    %v455 = vsel %vm409, %v366, %v398
    %v456 = vsel %vm409, %v368, %v400
    %v457 = vsel %vm409, %v370, %v402
    %v458 = vadd.f32 %v259, %v442
    %v459 = vadd.f32 %v260, %v443
    %v460 = vadd.f32 %v261, %v444
    %v461 = vadd.f32 %v262, %v445
    %v462 = vadd.f32 %v263, %v446
    %v463 = vadd.f32 %v264, %v447
    %v464 = vadd.f32 %v265, %v448
    %v465 = vadd.f32 %v266, %v449
    %v466 = vadd.f32 %v267, %v450
    %v467 = vadd.f32 %v268, %v451
    %v468 = vadd.f32 %v269, %v452
    %v469 = vadd.f32 %v270, %v453
    %v470 = vadd.f32 %v271, %v454
    %v471 = vadd.f32 %v272, %v455
    %v472 = vadd.f32 %v273, %v456
    %v473 = vadd.f32 %v274, %v457
    %474 = vrot.lane.b32.xlu0 %v426, 4
    %v475 = vpop.permute.xlu0 %474
    %476 = vrot.lane.b32.xlu0 %v427, 4
    %v477 = vpop.permute.xlu0 %476
    %478 = vrot.lane.b32.xlu0 %v428, 4
    %v479 = vpop.permute.xlu0 %478
    %480 = vrot.lane.b32.xlu0 %v429, 4
    %v481 = vpop.permute.xlu0 %480
    %482 = vrot.lane.b32.xlu0 %v430, 4
    %v483 = vpop.permute.xlu0 %482
    %484 = vrot.lane.b32.xlu0 %v431, 4
    %v485 = vpop.permute.xlu0 %484
    %486 = vrot.lane.b32.xlu0 %v432, 4
    %v487 = vpop.permute.xlu0 %486
    %488 = vrot.lane.b32.xlu0 %v433, 4
    %v489 = vpop.permute.xlu0 %488
    %490 = vrot.lane.b32.xlu0 %v434, 4
    %v491 = vpop.permute.xlu0 %490
    %492 = vrot.lane.b32.xlu0 %v435, 4
    %v493 = vpop.permute.xlu0 %492
    %494 = vrot.lane.b32.xlu0 %v436, 4
    %v495 = vpop.permute.xlu0 %494
    %496 = vrot.lane.b32.xlu0 %v437, 4
    %v497 = vpop.permute.xlu0 %496
    %498 = vrot.lane.b32.xlu0 %v438, 4
    %v499 = vpop.permute.xlu0 %498
    %500 = vrot.lane.b32.xlu0 %v439, 4
    %v501 = vpop.permute.xlu0 %500
    %502 = vrot.lane.b32.xlu0 %v440, 4
    %v503 = vpop.permute.xlu0 %502
    %504 = vrot.lane.b32.xlu0 %v441, 4
    %v505 = vpop.permute.xlu0 %504
    %506 = vrot.lane.b32.xlu0 %v426, 124
    %v507 = vpop.permute.xlu0 %506
    %508 = vrot.lane.b32.xlu0 %v427, 124
    %v509 = vpop.permute.xlu0 %508
    %510 = vrot.lane.b32.xlu0 %v428, 124
    %v511 = vpop.permute.xlu0 %510
    %512 = vrot.lane.b32.xlu0 %v429, 124
    %v513 = vpop.permute.xlu0 %512
    %514 = vrot.lane.b32.xlu0 %v430, 124
    %v515 = vpop.permute.xlu0 %514
    %516 = vrot.lane.b32.xlu0 %v431, 124
    %v517 = vpop.permute.xlu0 %516
    %518 = vrot.lane.b32.xlu0 %v432, 124
    %v519 = vpop.permute.xlu0 %518
    %520 = vrot.lane.b32.xlu0 %v433, 124
    %v521 = vpop.permute.xlu0 %520
    %522 = vrot.lane.b32.xlu0 %v434, 124
    %v523 = vpop.permute.xlu0 %522
    %524 = vrot.lane.b32.xlu0 %v435, 124
    %v525 = vpop.permute.xlu0 %524
    %526 = vrot.lane.b32.xlu0 %v436, 124
    %v527 = vpop.permute.xlu0 %526
    %528 = vrot.lane.b32.xlu0 %v437, 124
    %v529 = vpop.permute.xlu0 %528
    %530 = vrot.lane.b32.xlu0 %v438, 124
    %v531 = vpop.permute.xlu0 %530
    %532 = vrot.lane.b32.xlu0 %v439, 124
    %v533 = vpop.permute.xlu0 %532
    %534 = vrot.lane.b32.xlu0 %v440, 124
    %v535 = vpop.permute.xlu0 %534
    %536 = vrot.lane.b32.xlu0 %v441, 124
    %v537 = vpop.permute.xlu0 %536
    %538 = vrot.lane.b32.xlu0 %v458, 4
    %v539 = vpop.permute.xlu0 %538
    %540 = vrot.lane.b32.xlu0 %v459, 4
    %v541 = vpop.permute.xlu0 %540
    %542 = vrot.lane.b32.xlu0 %v460, 4
    %v543 = vpop.permute.xlu0 %542
    %544 = vrot.lane.b32.xlu0 %v461, 4
    %v545 = vpop.permute.xlu0 %544
    %546 = vrot.lane.b32.xlu0 %v462, 4
    %v547 = vpop.permute.xlu0 %546
    %548 = vrot.lane.b32.xlu0 %v463, 4
    %v549 = vpop.permute.xlu0 %548
    %550 = vrot.lane.b32.xlu0 %v464, 4
    %v551 = vpop.permute.xlu0 %550
    %552 = vrot.lane.b32.xlu0 %v465, 4
    %v553 = vpop.permute.xlu0 %552
    %554 = vrot.lane.b32.xlu0 %v466, 4
    %v555 = vpop.permute.xlu0 %554
    %556 = vrot.lane.b32.xlu0 %v467, 4
    %v557 = vpop.permute.xlu0 %556
    %558 = vrot.lane.b32.xlu0 %v468, 4
    %v559 = vpop.permute.xlu0 %558
    %560 = vrot.lane.b32.xlu0 %v469, 4
    %v561 = vpop.permute.xlu0 %560
    %562 = vrot.lane.b32.xlu0 %v470, 4
    %v563 = vpop.permute.xlu0 %562
    %564 = vrot.lane.b32.xlu0 %v471, 4
    %v565 = vpop.permute.xlu0 %564
    %566 = vrot.lane.b32.xlu0 %v472, 4
    %v567 = vpop.permute.xlu0 %566
    %568 = vrot.lane.b32.xlu0 %v473, 4
    %v569 = vpop.permute.xlu0 %568
    %570 = vrot.lane.b32.xlu0 %v458, 124
    %v571 = vpop.permute.xlu0 %570
    %572 = vrot.lane.b32.xlu0 %v459, 124
    %v573 = vpop.permute.xlu0 %572
    %574 = vrot.lane.b32.xlu0 %v460, 124
    %v575 = vpop.permute.xlu0 %574
    %576 = vrot.lane.b32.xlu0 %v461, 124
    %v577 = vpop.permute.xlu0 %576
    %578 = vrot.lane.b32.xlu0 %v462, 124
    %v579 = vpop.permute.xlu0 %578
    %580 = vrot.lane.b32.xlu0 %v463, 124
    %v581 = vpop.permute.xlu0 %580
    %582 = vrot.lane.b32.xlu0 %v464, 124
    %v583 = vpop.permute.xlu0 %582
    %584 = vrot.lane.b32.xlu0 %v465, 124
    %v585 = vpop.permute.xlu0 %584
    %586 = vrot.lane.b32.xlu0 %v466, 124
    %v587 = vpop.permute.xlu0 %586
    %588 = vrot.lane.b32.xlu0 %v467, 124
    %v589 = vpop.permute.xlu0 %588
    %590 = vrot.lane.b32.xlu0 %v468, 124
    %v591 = vpop.permute.xlu0 %590
    %592 = vrot.lane.b32.xlu0 %v469, 124
    %v593 = vpop.permute.xlu0 %592
    %594 = vrot.lane.b32.xlu0 %v470, 124
    %v595 = vpop.permute.xlu0 %594
    %596 = vrot.lane.b32.xlu0 %v471, 124
    %v597 = vpop.permute.xlu0 %596
    %598 = vrot.lane.b32.xlu0 %v472, 124
    %v599 = vpop.permute.xlu0 %598
    %600 = vrot.lane.b32.xlu0 %v473, 124
    %v601 = vpop.permute.xlu0 %600
    %602 = vrot.lane.b32.xlu0 %v59, 4
    %v603 = vpop.permute.xlu0 %602
    %v604 = vxor.u32 %v59, 4
    %vm605 = vcmp.eq.s32.totalorder %v603, %v604
    %v606 = vsel %vm605, 1, 0
    %v607 = vperm.slane %v606, 0
    %vm608 = vcmp.eq.s32.totalorder %v607, 1
    %v609 = vsel %vm608, %v475, %v507
    %v610 = vsel %vm608, %v477, %v509
    %v611 = vsel %vm608, %v479, %v511
    %v612 = vsel %vm608, %v481, %v513
    %v613 = vsel %vm608, %v483, %v515
    %v614 = vsel %vm608, %v485, %v517
    %v615 = vsel %vm608, %v487, %v519
    %v616 = vsel %vm608, %v489, %v521
    %v617 = vsel %vm608, %v491, %v523
    %v618 = vsel %vm608, %v493, %v525
    %v619 = vsel %vm608, %v495, %v527
    %v620 = vsel %vm608, %v497, %v529
    %v621 = vsel %vm608, %v499, %v531
    %v622 = vsel %vm608, %v501, %v533
    %v623 = vsel %vm608, %v503, %v535
    %v624 = vsel %vm608, %v505, %v537
    %v625 = vadd.f32 %v426, %v609
    %v626 = vadd.f32 %v427, %v610
    %v627 = vadd.f32 %v428, %v611
    %v628 = vadd.f32 %v429, %v612
    %v629 = vadd.f32 %v430, %v613
    %v630 = vadd.f32 %v431, %v614
    %v631 = vadd.f32 %v432, %v615
    %v632 = vadd.f32 %v433, %v616
    %v633 = vadd.f32 %v434, %v617
    %v634 = vadd.f32 %v435, %v618
    %v635 = vadd.f32 %v436, %v619
    %v636 = vadd.f32 %v437, %v620
    %v637 = vadd.f32 %v438, %v621
    %v638 = vadd.f32 %v439, %v622
    %v639 = vadd.f32 %v440, %v623
    %v640 = vadd.f32 %v441, %v624
    %v641 = vsel %vm608, %v539, %v571
    %v642 = vsel %vm608, %v541, %v573
    %v643 = vsel %vm608, %v543, %v575
    %v644 = vsel %vm608, %v545, %v577
    %v645 = vsel %vm608, %v547, %v579
    %v646 = vsel %vm608, %v549, %v581
    %v647 = vsel %vm608, %v551, %v583
    %v648 = vsel %vm608, %v553, %v585
    %v649 = vsel %vm608, %v555, %v587
    %v650 = vsel %vm608, %v557, %v589
    %v651 = vsel %vm608, %v559, %v591
    %v652 = vsel %vm608, %v561, %v593
    %v653 = vsel %vm608, %v563, %v595
    %v654 = vsel %vm608, %v565, %v597
    %v655 = vsel %vm608, %v567, %v599
    %v656 = vsel %vm608, %v569, %v601
    %v657 = vadd.f32 %v458, %v641
    %v658 = vadd.f32 %v459, %v642
    %v659 = vadd.f32 %v460, %v643
    %v660 = vadd.f32 %v461, %v644
    %v661 = vadd.f32 %v462, %v645
    %v662 = vadd.f32 %v463, %v646
    %v663 = vadd.f32 %v464, %v647
    %v664 = vadd.f32 %v465, %v648
    %v665 = vadd.f32 %v466, %v649
    %v666 = vadd.f32 %v467, %v650
    %v667 = vadd.f32 %v468, %v651
    %v668 = vadd.f32 %v469, %v652
    %v669 = vadd.f32 %v470, %v653
    %v670 = vadd.f32 %v471, %v654
    %v671 = vadd.f32 %v472, %v655
    %v672 = vadd.f32 %v473, %v656
    %673 = vrot.lane.b32.xlu0 %v625, 8
    %v674 = vpop.permute.xlu0 %673
    %675 = vrot.lane.b32.xlu0 %v626, 8
    %v676 = vpop.permute.xlu0 %675
    %677 = vrot.lane.b32.xlu0 %v627, 8
    %v678 = vpop.permute.xlu0 %677
    %679 = vrot.lane.b32.xlu0 %v628, 8
    %v680 = vpop.permute.xlu0 %679
    %681 = vrot.lane.b32.xlu0 %v629, 8
    %v682 = vpop.permute.xlu0 %681
    %683 = vrot.lane.b32.xlu0 %v630, 8
    %v684 = vpop.permute.xlu0 %683
    %685 = vrot.lane.b32.xlu0 %v631, 8
    %v686 = vpop.permute.xlu0 %685
    %687 = vrot.lane.b32.xlu0 %v632, 8
    %v688 = vpop.permute.xlu0 %687
    %689 = vrot.lane.b32.xlu0 %v633, 8
    %v690 = vpop.permute.xlu0 %689
    %691 = vrot.lane.b32.xlu0 %v634, 8
    %v692 = vpop.permute.xlu0 %691
    %693 = vrot.lane.b32.xlu0 %v635, 8
    %v694 = vpop.permute.xlu0 %693
    %695 = vrot.lane.b32.xlu0 %v636, 8
    %v696 = vpop.permute.xlu0 %695
    %697 = vrot.lane.b32.xlu0 %v637, 8
    %v698 = vpop.permute.xlu0 %697
    %699 = vrot.lane.b32.xlu0 %v638, 8
    %v700 = vpop.permute.xlu0 %699
    %701 = vrot.lane.b32.xlu0 %v639, 8
    %v702 = vpop.permute.xlu0 %701
    %703 = vrot.lane.b32.xlu0 %v640, 8
    %v704 = vpop.permute.xlu0 %703
    %705 = vrot.lane.b32.xlu0 %v625, 120
    %v706 = vpop.permute.xlu0 %705
    %707 = vrot.lane.b32.xlu0 %v626, 120
    %v708 = vpop.permute.xlu0 %707
    %709 = vrot.lane.b32.xlu0 %v627, 120
    %v710 = vpop.permute.xlu0 %709
    %711 = vrot.lane.b32.xlu0 %v628, 120
    %v712 = vpop.permute.xlu0 %711
    %713 = vrot.lane.b32.xlu0 %v629, 120
    %v714 = vpop.permute.xlu0 %713
    %715 = vrot.lane.b32.xlu0 %v630, 120
    %v716 = vpop.permute.xlu0 %715
    %717 = vrot.lane.b32.xlu0 %v631, 120
    %v718 = vpop.permute.xlu0 %717
    %719 = vrot.lane.b32.xlu0 %v632, 120
    %v720 = vpop.permute.xlu0 %719
    %721 = vrot.lane.b32.xlu0 %v633, 120
    %v722 = vpop.permute.xlu0 %721
    %723 = vrot.lane.b32.xlu0 %v634, 120
    %v724 = vpop.permute.xlu0 %723
    %725 = vrot.lane.b32.xlu0 %v635, 120
    %v726 = vpop.permute.xlu0 %725
    %727 = vrot.lane.b32.xlu0 %v636, 120
    %v728 = vpop.permute.xlu0 %727
    %729 = vrot.lane.b32.xlu0 %v637, 120
    %v730 = vpop.permute.xlu0 %729
    %731 = vrot.lane.b32.xlu0 %v638, 120
    %v732 = vpop.permute.xlu0 %731
    %733 = vrot.lane.b32.xlu0 %v639, 120
    %v734 = vpop.permute.xlu0 %733
    %735 = vrot.lane.b32.xlu0 %v640, 120
    %v736 = vpop.permute.xlu0 %735
    %737 = vrot.lane.b32.xlu0 %v657, 8
    %v738 = vpop.permute.xlu0 %737
    %739 = vrot.lane.b32.xlu0 %v658, 8
    %v740 = vpop.permute.xlu0 %739
    %741 = vrot.lane.b32.xlu0 %v659, 8
    %v742 = vpop.permute.xlu0 %741
    %743 = vrot.lane.b32.xlu0 %v660, 8
    %v744 = vpop.permute.xlu0 %743
    %745 = vrot.lane.b32.xlu0 %v661, 8
    %v746 = vpop.permute.xlu0 %745
    %747 = vrot.lane.b32.xlu0 %v662, 8
    %v748 = vpop.permute.xlu0 %747
    %749 = vrot.lane.b32.xlu0 %v663, 8
    %v750 = vpop.permute.xlu0 %749
    %751 = vrot.lane.b32.xlu0 %v664, 8
    %v752 = vpop.permute.xlu0 %751
    %753 = vrot.lane.b32.xlu0 %v665, 8
    %v754 = vpop.permute.xlu0 %753
    %755 = vrot.lane.b32.xlu0 %v666, 8
    %v756 = vpop.permute.xlu0 %755
    %757 = vrot.lane.b32.xlu0 %v667, 8
    %v758 = vpop.permute.xlu0 %757
    %759 = vrot.lane.b32.xlu0 %v668, 8
    %v760 = vpop.permute.xlu0 %759
    %761 = vrot.lane.b32.xlu0 %v669, 8
    %v762 = vpop.permute.xlu0 %761
    %763 = vrot.lane.b32.xlu0 %v670, 8
    %v764 = vpop.permute.xlu0 %763
    %765 = vrot.lane.b32.xlu0 %v671, 8
    %v766 = vpop.permute.xlu0 %765
    %767 = vrot.lane.b32.xlu0 %v672, 8
    %v768 = vpop.permute.xlu0 %767
    %769 = vrot.lane.b32.xlu0 %v657, 120
    %v770 = vpop.permute.xlu0 %769
    %771 = vrot.lane.b32.xlu0 %v658, 120
    %v772 = vpop.permute.xlu0 %771
    %773 = vrot.lane.b32.xlu0 %v659, 120
    %v774 = vpop.permute.xlu0 %773
    %775 = vrot.lane.b32.xlu0 %v660, 120
    %v776 = vpop.permute.xlu0 %775
    %777 = vrot.lane.b32.xlu0 %v661, 120
    %v778 = vpop.permute.xlu0 %777
    %779 = vrot.lane.b32.xlu0 %v662, 120
    %v780 = vpop.permute.xlu0 %779
    %781 = vrot.lane.b32.xlu0 %v663, 120
    %v782 = vpop.permute.xlu0 %781
    %783 = vrot.lane.b32.xlu0 %v664, 120
    %v784 = vpop.permute.xlu0 %783
    %785 = vrot.lane.b32.xlu0 %v665, 120
    %v786 = vpop.permute.xlu0 %785
    %787 = vrot.lane.b32.xlu0 %v666, 120
    %v788 = vpop.permute.xlu0 %787
    %789 = vrot.lane.b32.xlu0 %v667, 120
    %v790 = vpop.permute.xlu0 %789
    %791 = vrot.lane.b32.xlu0 %v668, 120
    %v792 = vpop.permute.xlu0 %791
    %793 = vrot.lane.b32.xlu0 %v669, 120
    %v794 = vpop.permute.xlu0 %793
    %795 = vrot.lane.b32.xlu0 %v670, 120
    %v796 = vpop.permute.xlu0 %795
    %797 = vrot.lane.b32.xlu0 %v671, 120
    %v798 = vpop.permute.xlu0 %797
    %799 = vrot.lane.b32.xlu0 %v672, 120
    %v800 = vpop.permute.xlu0 %799
    %801 = vrot.lane.b32.xlu0 %v59, 8
    %v802 = vpop.permute.xlu0 %801
    %v803 = vxor.u32 %v59, 8
    %vm804 = vcmp.eq.s32.totalorder %v802, %v803
    %v805 = vsel %vm804, 1, 0
    %v806 = vperm.slane %v805, 0
    %vm807 = vcmp.eq.s32.totalorder %v806, 1
    %v808 = vsel %vm807, %v674, %v706
    %v809 = vsel %vm807, %v676, %v708
    %v810 = vsel %vm807, %v678, %v710
    %v811 = vsel %vm807, %v680, %v712
    %v812 = vsel %vm807, %v682, %v714
    %v813 = vsel %vm807, %v684, %v716
    %v814 = vsel %vm807, %v686, %v718
    %v815 = vsel %vm807, %v688, %v720
    %v816 = vsel %vm807, %v690, %v722
    %v817 = vsel %vm807, %v692, %v724
    %v818 = vsel %vm807, %v694, %v726
    %v819 = vsel %vm807, %v696, %v728
    %v820 = vsel %vm807, %v698, %v730
    %v821 = vsel %vm807, %v700, %v732
    %v822 = vsel %vm807, %v702, %v734
    %v823 = vsel %vm807, %v704, %v736
    %v824 = vadd.f32 %v625, %v808
    %v825 = vadd.f32 %v626, %v809
    %v826 = vadd.f32 %v627, %v810
    %v827 = vadd.f32 %v628, %v811
    %v828 = vadd.f32 %v629, %v812
    %v829 = vadd.f32 %v630, %v813
    %v830 = vadd.f32 %v631, %v814
    %v831 = vadd.f32 %v632, %v815
    %v832 = vadd.f32 %v633, %v816
    %v833 = vadd.f32 %v634, %v817
    %v834 = vadd.f32 %v635, %v818
    %v835 = vadd.f32 %v636, %v819
    %v836 = vadd.f32 %v637, %v820
    %v837 = vadd.f32 %v638, %v821
    %v838 = vadd.f32 %v639, %v822
    %v839 = vadd.f32 %v640, %v823
    %v840 = vsel %vm807, %v738, %v770
    %v841 = vsel %vm807, %v740, %v772
    %v842 = vsel %vm807, %v742, %v774
    %v843 = vsel %vm807, %v744, %v776
    %v844 = vsel %vm807, %v746, %v778
    %v845 = vsel %vm807, %v748, %v780
    %v846 = vsel %vm807, %v750, %v782
    %v847 = vsel %vm807, %v752, %v784
    %v848 = vsel %vm807, %v754, %v786
    %v849 = vsel %vm807, %v756, %v788
    %v850 = vsel %vm807, %v758, %v790
    %v851 = vsel %vm807, %v760, %v792
    %v852 = vsel %vm807, %v762, %v794
    %v853 = vsel %vm807, %v764, %v796
    %v854 = vsel %vm807, %v766, %v798
    %v855 = vsel %vm807, %v768, %v800
    %v856 = vadd.f32 %v657, %v840
    %v857 = vadd.f32 %v658, %v841
    %v858 = vadd.f32 %v659, %v842
    %v859 = vadd.f32 %v660, %v843
    %v860 = vadd.f32 %v661, %v844
    %v861 = vadd.f32 %v662, %v845
    %v862 = vadd.f32 %v663, %v846
    %v863 = vadd.f32 %v664, %v847
    %v864 = vadd.f32 %v665, %v848
    %v865 = vadd.f32 %v666, %v849
    %v866 = vadd.f32 %v667, %v850
    %v867 = vadd.f32 %v668, %v851
    %v868 = vadd.f32 %v669, %v852
    %v869 = vadd.f32 %v670, %v853
    %v870 = vadd.f32 %v671, %v854
    %v871 = vadd.f32 %v672, %v855
    %872 = vrot.lane.b32.xlu0 %v824, 16
    %v873 = vpop.permute.xlu0 %872
    %874 = vrot.lane.b32.xlu0 %v825, 16
    %v875 = vpop.permute.xlu0 %874
    %876 = vrot.lane.b32.xlu0 %v826, 16
    %v877 = vpop.permute.xlu0 %876
    %878 = vrot.lane.b32.xlu0 %v827, 16
    %v879 = vpop.permute.xlu0 %878
    %880 = vrot.lane.b32.xlu0 %v828, 16
    %v881 = vpop.permute.xlu0 %880
    %882 = vrot.lane.b32.xlu0 %v829, 16
    %v883 = vpop.permute.xlu0 %882
    %884 = vrot.lane.b32.xlu0 %v830, 16
    %v885 = vpop.permute.xlu0 %884
    %886 = vrot.lane.b32.xlu0 %v831, 16
    %v887 = vpop.permute.xlu0 %886
    %888 = vrot.lane.b32.xlu0 %v832, 16
    %v889 = vpop.permute.xlu0 %888
    %890 = vrot.lane.b32.xlu0 %v833, 16
    %v891 = vpop.permute.xlu0 %890
    %892 = vrot.lane.b32.xlu0 %v834, 16
    %v893 = vpop.permute.xlu0 %892
    %894 = vrot.lane.b32.xlu0 %v835, 16
    %v895 = vpop.permute.xlu0 %894
    %896 = vrot.lane.b32.xlu0 %v836, 16
    %v897 = vpop.permute.xlu0 %896
    %898 = vrot.lane.b32.xlu0 %v837, 16
    %v899 = vpop.permute.xlu0 %898
    %900 = vrot.lane.b32.xlu0 %v838, 16
    %v901 = vpop.permute.xlu0 %900
    %902 = vrot.lane.b32.xlu0 %v839, 16
    %v903 = vpop.permute.xlu0 %902
    %904 = vrot.lane.b32.xlu0 %v824, 112
    %v905 = vpop.permute.xlu0 %904
    %906 = vrot.lane.b32.xlu0 %v825, 112
    %v907 = vpop.permute.xlu0 %906
    %908 = vrot.lane.b32.xlu0 %v826, 112
    %v909 = vpop.permute.xlu0 %908
    %910 = vrot.lane.b32.xlu0 %v827, 112
    %v911 = vpop.permute.xlu0 %910
    %912 = vrot.lane.b32.xlu0 %v828, 112
    %v913 = vpop.permute.xlu0 %912
    %914 = vrot.lane.b32.xlu0 %v829, 112
    %v915 = vpop.permute.xlu0 %914
    %916 = vrot.lane.b32.xlu0 %v830, 112
    %v917 = vpop.permute.xlu0 %916
    %918 = vrot.lane.b32.xlu0 %v831, 112
    %v919 = vpop.permute.xlu0 %918
    %920 = vrot.lane.b32.xlu0 %v832, 112
    %v921 = vpop.permute.xlu0 %920
    %922 = vrot.lane.b32.xlu0 %v833, 112
    %v923 = vpop.permute.xlu0 %922
    %924 = vrot.lane.b32.xlu0 %v834, 112
    %v925 = vpop.permute.xlu0 %924
    %926 = vrot.lane.b32.xlu0 %v835, 112
    %v927 = vpop.permute.xlu0 %926
    %928 = vrot.lane.b32.xlu0 %v836, 112
    %v929 = vpop.permute.xlu0 %928
    %930 = vrot.lane.b32.xlu0 %v837, 112
    %v931 = vpop.permute.xlu0 %930
    %932 = vrot.lane.b32.xlu0 %v838, 112
    %v933 = vpop.permute.xlu0 %932
    %934 = vrot.lane.b32.xlu0 %v839, 112
    %v935 = vpop.permute.xlu0 %934
    %936 = vrot.lane.b32.xlu0 %v856, 16
    %v937 = vpop.permute.xlu0 %936
    %938 = vrot.lane.b32.xlu0 %v857, 16
    %v939 = vpop.permute.xlu0 %938
    %940 = vrot.lane.b32.xlu0 %v858, 16
    %v941 = vpop.permute.xlu0 %940
    %942 = vrot.lane.b32.xlu0 %v859, 16
    %v943 = vpop.permute.xlu0 %942
    %944 = vrot.lane.b32.xlu0 %v860, 16
    %v945 = vpop.permute.xlu0 %944
    %946 = vrot.lane.b32.xlu0 %v861, 16
    %v947 = vpop.permute.xlu0 %946
    %948 = vrot.lane.b32.xlu0 %v862, 16
    %v949 = vpop.permute.xlu0 %948
    %950 = vrot.lane.b32.xlu0 %v863, 16
    %v951 = vpop.permute.xlu0 %950
    %952 = vrot.lane.b32.xlu0 %v864, 16
    %v953 = vpop.permute.xlu0 %952
    %954 = vrot.lane.b32.xlu0 %v865, 16
    %v955 = vpop.permute.xlu0 %954
    %956 = vrot.lane.b32.xlu0 %v866, 16
    %v957 = vpop.permute.xlu0 %956
    %958 = vrot.lane.b32.xlu0 %v867, 16
    %v959 = vpop.permute.xlu0 %958
    %960 = vrot.lane.b32.xlu0 %v868, 16
    %v961 = vpop.permute.xlu0 %960
    %962 = vrot.lane.b32.xlu0 %v869, 16
    %v963 = vpop.permute.xlu0 %962
    %964 = vrot.lane.b32.xlu0 %v870, 16
    %v965 = vpop.permute.xlu0 %964
    %966 = vrot.lane.b32.xlu0 %v871, 16
    %v967 = vpop.permute.xlu0 %966
    %968 = vrot.lane.b32.xlu0 %v856, 112
    %v969 = vpop.permute.xlu0 %968
    %970 = vrot.lane.b32.xlu0 %v857, 112
    %v971 = vpop.permute.xlu0 %970
    %972 = vrot.lane.b32.xlu0 %v858, 112
    %v973 = vpop.permute.xlu0 %972
    %974 = vrot.lane.b32.xlu0 %v859, 112
    %v975 = vpop.permute.xlu0 %974
    %976 = vrot.lane.b32.xlu0 %v860, 112
    %v977 = vpop.permute.xlu0 %976
    %978 = vrot.lane.b32.xlu0 %v861, 112
    %v979 = vpop.permute.xlu0 %978
    %980 = vrot.lane.b32.xlu0 %v862, 112
    %v981 = vpop.permute.xlu0 %980
    %982 = vrot.lane.b32.xlu0 %v863, 112
    %v983 = vpop.permute.xlu0 %982
    %984 = vrot.lane.b32.xlu0 %v864, 112
    %v985 = vpop.permute.xlu0 %984
    %986 = vrot.lane.b32.xlu0 %v865, 112
    %v987 = vpop.permute.xlu0 %986
    %988 = vrot.lane.b32.xlu0 %v866, 112
    %v989 = vpop.permute.xlu0 %988
    %990 = vrot.lane.b32.xlu0 %v867, 112
    %v991 = vpop.permute.xlu0 %990
    %992 = vrot.lane.b32.xlu0 %v868, 112
    %v993 = vpop.permute.xlu0 %992
    %994 = vrot.lane.b32.xlu0 %v869, 112
    %v995 = vpop.permute.xlu0 %994
    %996 = vrot.lane.b32.xlu0 %v870, 112
    %v997 = vpop.permute.xlu0 %996
    %998 = vrot.lane.b32.xlu0 %v871, 112
    %v999 = vpop.permute.xlu0 %998
    %1000 = vrot.lane.b32.xlu0 %v59, 16
    %v1001 = vpop.permute.xlu0 %1000
    %v1002 = vxor.u32 %v59, 16
    %vm1003 = vcmp.eq.s32.totalorder %v1001, %v1002
    %v1004 = vsel %vm1003, 1, 0
    %v1005 = vperm.slane %v1004, 0
    %vm1006 = vcmp.eq.s32.totalorder %v1005, 1
    %v1007 = vsel %vm1006, %v873, %v905
    %v1008 = vsel %vm1006, %v875, %v907
    %v1009 = vsel %vm1006, %v877, %v909
    %v1010 = vsel %vm1006, %v879, %v911
    %v1011 = vsel %vm1006, %v881, %v913
    %v1012 = vsel %vm1006, %v883, %v915
    %v1013 = vsel %vm1006, %v885, %v917
    %v1014 = vsel %vm1006, %v887, %v919
    %v1015 = vsel %vm1006, %v889, %v921
    %v1016 = vsel %vm1006, %v891, %v923
    %v1017 = vsel %vm1006, %v893, %v925
    %v1018 = vsel %vm1006, %v895, %v927
    %v1019 = vsel %vm1006, %v897, %v929
    %v1020 = vsel %vm1006, %v899, %v931
    %v1021 = vsel %vm1006, %v901, %v933
    %v1022 = vsel %vm1006, %v903, %v935
    %v1023 = vadd.f32 %v824, %v1007
    %v1024 = vadd.f32 %v825, %v1008
    %v1025 = vadd.f32 %v826, %v1009
    %v1026 = vadd.f32 %v827, %v1010
    %v1027 = vadd.f32 %v828, %v1011
    %v1028 = vadd.f32 %v829, %v1012
    %v1029 = vadd.f32 %v830, %v1013
    %v1030 = vadd.f32 %v831, %v1014
    %v1031 = vadd.f32 %v832, %v1015
    %v1032 = vadd.f32 %v833, %v1016
    %v1033 = vadd.f32 %v834, %v1017
    %v1034 = vadd.f32 %v835, %v1018
    %v1035 = vadd.f32 %v836, %v1019
    %v1036 = vadd.f32 %v837, %v1020
    %v1037 = vadd.f32 %v838, %v1021
    %v1038 = vadd.f32 %v839, %v1022
    %v1039 = vsel %vm1006, %v937, %v969
    %v1040 = vsel %vm1006, %v939, %v971
    %v1041 = vsel %vm1006, %v941, %v973
    %v1042 = vsel %vm1006, %v943, %v975
    %v1043 = vsel %vm1006, %v945, %v977
    %v1044 = vsel %vm1006, %v947, %v979
    %v1045 = vsel %vm1006, %v949, %v981
    %v1046 = vsel %vm1006, %v951, %v983
    %v1047 = vsel %vm1006, %v953, %v985
    %v1048 = vsel %vm1006, %v955, %v987
    %v1049 = vsel %vm1006, %v957, %v989
    %v1050 = vsel %vm1006, %v959, %v991
    %v1051 = vsel %vm1006, %v961, %v993
    %v1052 = vsel %vm1006, %v963, %v995
    %v1053 = vsel %vm1006, %v965, %v997
    %v1054 = vsel %vm1006, %v967, %v999
    %v1055 = vadd.f32 %v856, %v1039
    %v1056 = vadd.f32 %v857, %v1040
    %v1057 = vadd.f32 %v858, %v1041
    %v1058 = vadd.f32 %v859, %v1042
    %v1059 = vadd.f32 %v860, %v1043
    %v1060 = vadd.f32 %v861, %v1044
    %v1061 = vadd.f32 %v862, %v1045
    %v1062 = vadd.f32 %v863, %v1046
    %v1063 = vadd.f32 %v864, %v1047
    %v1064 = vadd.f32 %v865, %v1048
    %v1065 = vadd.f32 %v866, %v1049
    %v1066 = vadd.f32 %v867, %v1050
    %v1067 = vadd.f32 %v868, %v1051
    %v1068 = vadd.f32 %v869, %v1052
    %v1069 = vadd.f32 %v870, %v1053
    %v1070 = vadd.f32 %v871, %v1054
    %v1071 = vmul.f32 %v1023, 0.03125
    %v1072 = vmul.f32 %v1024, 0.03125
    %v1073 = vmul.f32 %v1025, 0.03125
    %v1074 = vmul.f32 %v1026, 0.03125
    %v1075 = vmul.f32 %v1027, 0.03125
    %v1076 = vmul.f32 %v1028, 0.03125
    %v1077 = vmul.f32 %v1029, 0.03125
    %v1078 = vmul.f32 %v1030, 0.03125
    %v1079 = vmul.f32 %v1031, 0.03125
    %v1080 = vmul.f32 %v1032, 0.03125
    %v1081 = vmul.f32 %v1033, 0.03125
    %v1082 = vmul.f32 %v1034, 0.03125
    %v1083 = vmul.f32 %v1035, 0.03125
    %v1084 = vmul.f32 %v1036, 0.03125
    %v1085 = vmul.f32 %v1037, 0.03125
    %v1086 = vmul.f32 %v1038, 0.03125
    %v1087 = vmul.f32 %v1055, 0.03125
    %v1088 = vmul.f32 %v1056, 0.03125
    %v1089 = vmul.f32 %v1057, 0.03125
    %v1090 = vmul.f32 %v1058, 0.03125
    %v1091 = vmul.f32 %v1059, 0.03125
    %v1092 = vmul.f32 %v1060, 0.03125
    %v1093 = vmul.f32 %v1061, 0.03125
    %v1094 = vmul.f32 %v1062, 0.03125
    %v1095 = vmul.f32 %v1063, 0.03125
    %v1096 = vmul.f32 %v1064, 0.03125
    %v1097 = vmul.f32 %v1065, 0.03125
    %v1098 = vmul.f32 %v1066, 0.03125
    %v1099 = vmul.f32 %v1067, 0.03125
    %v1100 = vmul.f32 %v1068, 0.03125
    %v1101 = vmul.f32 %v1069, 0.03125
    %v1102 = vmul.f32 %v1070, 0.03125
    %v1103 = vmul.f32 %v1071, %v1071
    %v1104 = vmul.f32 %v1072, %v1072
    %v1105 = vmul.f32 %v1073, %v1073
    %v1106 = vmul.f32 %v1074, %v1074
    %v1107 = vmul.f32 %v1075, %v1075
    %v1108 = vmul.f32 %v1076, %v1076
    %v1109 = vmul.f32 %v1077, %v1077
    %v1110 = vmul.f32 %v1078, %v1078
    %v1111 = vmul.f32 %v1079, %v1079
    %v1112 = vmul.f32 %v1080, %v1080
    %v1113 = vmul.f32 %v1081, %v1081
    %v1114 = vmul.f32 %v1082, %v1082
    %v1115 = vmul.f32 %v1083, %v1083
    %v1116 = vmul.f32 %v1084, %v1084
    %v1117 = vmul.f32 %v1085, %v1085
    %v1118 = vmul.f32 %v1086, %v1086
    %v1119 = vsub.f32 %v1087, %v1103
    %v1120 = vsub.f32 %v1088, %v1104
    %v1121 = vsub.f32 %v1089, %v1105
    %v1122 = vsub.f32 %v1090, %v1106
    %v1123 = vsub.f32 %v1091, %v1107
    %v1124 = vsub.f32 %v1092, %v1108
    %v1125 = vsub.f32 %v1093, %v1109
    %v1126 = vsub.f32 %v1094, %v1110
    %v1127 = vsub.f32 %v1095, %v1111
    %v1128 = vsub.f32 %v1096, %v1112
    %v1129 = vsub.f32 %v1097, %v1113
    %v1130 = vsub.f32 %v1098, %v1114
    %v1131 = vsub.f32 %v1099, %v1115
    %v1132 = vsub.f32 %v1100, %v1116
    %v1133 = vsub.f32 %v1101, %v1117
    %v1134 = vsub.f32 %v1102, %v1118
    %v1135 = vmax.f32 %v1119, 0.0
    %v1136 = vmax.f32 %v1120, 0.0
    %v1137 = vmax.f32 %v1121, 0.0
    %v1138 = vmax.f32 %v1122, 0.0
    %v1139 = vmax.f32 %v1123, 0.0
    %v1140 = vmax.f32 %v1124, 0.0
    %v1141 = vmax.f32 %v1125, 0.0
    %v1142 = vmax.f32 %v1126, 0.0
    %v1143 = vmax.f32 %v1127, 0.0
    %v1144 = vmax.f32 %v1128, 0.0
    %v1145 = vmax.f32 %v1129, 0.0
    %v1146 = vmax.f32 %v1130, 0.0
    %v1147 = vmax.f32 %v1131, 0.0
    %v1148 = vmax.f32 %v1132, 0.0
    %v1149 = vmax.f32 %v1133, 0.0
    %v1150 = vmax.f32 %v1134, 0.0
    %v1151 = vadd.f32 %v1135, 1e-05
    %v1152 = vadd.f32 %v1136, 1e-05
    %v1153 = vadd.f32 %v1137, 1e-05
    %v1154 = vadd.f32 %v1138, 1e-05
    %v1155 = vadd.f32 %v1139, 1e-05
    %v1156 = vadd.f32 %v1140, 1e-05
    %v1157 = vadd.f32 %v1141, 1e-05
    %v1158 = vadd.f32 %v1142, 1e-05
    %v1159 = vadd.f32 %v1143, 1e-05
    %v1160 = vadd.f32 %v1144, 1e-05
    %v1161 = vadd.f32 %v1145, 1e-05
    %v1162 = vadd.f32 %v1146, 1e-05
    %v1163 = vadd.f32 %v1147, 1e-05
    %v1164 = vadd.f32 %v1148, 1e-05
    %v1165 = vadd.f32 %v1149, 1e-05
    %v1166 = vadd.f32 %v1150, 1e-05
    %v1167 = vrsqrt.pop %v1151
    %v1168 = vmul.f32 %v1167, %v1151
    %v1169 = vmul.f32 %v1168, %v1167
    %v1170 = vmul.f32 0.5, %v1169
    %v1171 = vsub.f32 1.5, %v1170
    %v1172 = vmul.f32 %v1167, %v1171
    %vm1173 = vweird.f32 %v1151
    %vm1174 = vweird.f32 %v1167
    %vm1175 = vmor %vm1173, %vm1174
    %v1176 = vsel %vm1175, %v1167, %v1172
    %v1177 = vrsqrt.pop %v1152
    %v1178 = vmul.f32 %v1177, %v1152
    %v1179 = vmul.f32 %v1178, %v1177
    %v1180 = vmul.f32 0.5, %v1179
    %v1181 = vsub.f32 1.5, %v1180
    %v1182 = vmul.f32 %v1177, %v1181
    %vm1183 = vweird.f32 %v1152
    %vm1184 = vweird.f32 %v1177
    %vm1185 = vmor %vm1183, %vm1184
    %v1186 = vsel %vm1185, %v1177, %v1182
    %v1187 = vrsqrt.pop %v1153
    %v1188 = vmul.f32 %v1187, %v1153
    %v1189 = vmul.f32 %v1188, %v1187
    %v1190 = vmul.f32 0.5, %v1189
    %v1191 = vsub.f32 1.5, %v1190
    %v1192 = vmul.f32 %v1187, %v1191
    %vm1193 = vweird.f32 %v1153
    %vm1194 = vweird.f32 %v1187
    %vm1195 = vmor %vm1193, %vm1194
    %v1196 = vsel %vm1195, %v1187, %v1192
    %v1197 = vrsqrt.pop %v1154
    %v1198 = vmul.f32 %v1197, %v1154
    %v1199 = vmul.f32 %v1198, %v1197
    %v1200 = vmul.f32 0.5, %v1199
    %v1201 = vsub.f32 1.5, %v1200
    %v1202 = vmul.f32 %v1197, %v1201
    %vm1203 = vweird.f32 %v1154
    %vm1204 = vweird.f32 %v1197
    %vm1205 = vmor %vm1203, %vm1204
    %v1206 = vsel %vm1205, %v1197, %v1202
    %v1207 = vrsqrt.pop %v1155
    %v1208 = vmul.f32 %v1207, %v1155
    %v1209 = vmul.f32 %v1208, %v1207
    %v1210 = vmul.f32 0.5, %v1209
    %v1211 = vsub.f32 1.5, %v1210
    %v1212 = vmul.f32 %v1207, %v1211
    %vm1213 = vweird.f32 %v1155
    %vm1214 = vweird.f32 %v1207
    %vm1215 = vmor %vm1213, %vm1214
    %v1216 = vsel %vm1215, %v1207, %v1212
    %v1217 = vrsqrt.pop %v1156
    %v1218 = vmul.f32 %v1217, %v1156
    %v1219 = vmul.f32 %v1218, %v1217
    %v1220 = vmul.f32 0.5, %v1219
    %v1221 = vsub.f32 1.5, %v1220
    %v1222 = vmul.f32 %v1217, %v1221
    %vm1223 = vweird.f32 %v1156
    %vm1224 = vweird.f32 %v1217
    %vm1225 = vmor %vm1223, %vm1224
    %v1226 = vsel %vm1225, %v1217, %v1222
    %v1227 = vrsqrt.pop %v1157
    %v1228 = vmul.f32 %v1227, %v1157
    %v1229 = vmul.f32 %v1228, %v1227
    %v1230 = vmul.f32 0.5, %v1229
    %v1231 = vsub.f32 1.5, %v1230
    %v1232 = vmul.f32 %v1227, %v1231
    %vm1233 = vweird.f32 %v1157
    %vm1234 = vweird.f32 %v1227
    %vm1235 = vmor %vm1233, %vm1234
    %v1236 = vsel %vm1235, %v1227, %v1232
    %v1237 = vrsqrt.pop %v1158
    %v1238 = vmul.f32 %v1237, %v1158
    %v1239 = vmul.f32 %v1238, %v1237
    %v1240 = vmul.f32 0.5, %v1239
    %v1241 = vsub.f32 1.5, %v1240
    %v1242 = vmul.f32 %v1237, %v1241
    %vm1243 = vweird.f32 %v1158
    %vm1244 = vweird.f32 %v1237
    %vm1245 = vmor %vm1243, %vm1244
    %v1246 = vsel %vm1245, %v1237, %v1242
    %v1247 = vrsqrt.pop %v1159
    %v1248 = vmul.f32 %v1247, %v1159
    %v1249 = vmul.f32 %v1248, %v1247
    %v1250 = vmul.f32 0.5, %v1249
    %v1251 = vsub.f32 1.5, %v1250
    %v1252 = vmul.f32 %v1247, %v1251
    %vm1253 = vweird.f32 %v1159
    %vm1254 = vweird.f32 %v1247
    %vm1255 = vmor %vm1253, %vm1254
    %v1256 = vsel %vm1255, %v1247, %v1252
    %v1257 = vrsqrt.pop %v1160
    %v1258 = vmul.f32 %v1257, %v1160
    %v1259 = vmul.f32 %v1258, %v1257
    %v1260 = vmul.f32 0.5, %v1259
    %v1261 = vsub.f32 1.5, %v1260
    %v1262 = vmul.f32 %v1257, %v1261
    %vm1263 = vweird.f32 %v1160
    %vm1264 = vweird.f32 %v1257
    %vm1265 = vmor %vm1263, %vm1264
    %v1266 = vsel %vm1265, %v1257, %v1262
    %v1267 = vrsqrt.pop %v1161
    %v1268 = vmul.f32 %v1267, %v1161
    %v1269 = vmul.f32 %v1268, %v1267
    %v1270 = vmul.f32 0.5, %v1269
    %v1271 = vsub.f32 1.5, %v1270
    %v1272 = vmul.f32 %v1267, %v1271
    %vm1273 = vweird.f32 %v1161
    %vm1274 = vweird.f32 %v1267
    %vm1275 = vmor %vm1273, %vm1274
    %v1276 = vsel %vm1275, %v1267, %v1272
    %v1277 = vrsqrt.pop %v1162
    %v1278 = vmul.f32 %v1277, %v1162
    %v1279 = vmul.f32 %v1278, %v1277
    %v1280 = vmul.f32 0.5, %v1279
    %v1281 = vsub.f32 1.5, %v1280
    %v1282 = vmul.f32 %v1277, %v1281
    %vm1283 = vweird.f32 %v1162
    %vm1284 = vweird.f32 %v1277
    %vm1285 = vmor %vm1283, %vm1284
    %v1286 = vsel %vm1285, %v1277, %v1282
    %v1287 = vrsqrt.pop %v1163
    %v1288 = vmul.f32 %v1287, %v1163
    %v1289 = vmul.f32 %v1288, %v1287
    %v1290 = vmul.f32 0.5, %v1289
    %v1291 = vsub.f32 1.5, %v1290
    %v1292 = vmul.f32 %v1287, %v1291
    %vm1293 = vweird.f32 %v1163
    %vm1294 = vweird.f32 %v1287
    %vm1295 = vmor %vm1293, %vm1294
    %v1296 = vsel %vm1295, %v1287, %v1292
    %v1297 = vrsqrt.pop %v1164
    %v1298 = vmul.f32 %v1297, %v1164
    %v1299 = vmul.f32 %v1298, %v1297
    %v1300 = vmul.f32 0.5, %v1299
    %v1301 = vsub.f32 1.5, %v1300
    %v1302 = vmul.f32 %v1297, %v1301
    %vm1303 = vweird.f32 %v1164
    %vm1304 = vweird.f32 %v1297
    %vm1305 = vmor %vm1303, %vm1304
    %v1306 = vsel %vm1305, %v1297, %v1302
    %v1307 = vrsqrt.pop %v1165
    %v1308 = vmul.f32 %v1307, %v1165
    %v1309 = vmul.f32 %v1308, %v1307
    %v1310 = vmul.f32 0.5, %v1309
    %v1311 = vsub.f32 1.5, %v1310
    %v1312 = vmul.f32 %v1307, %v1311
    %vm1313 = vweird.f32 %v1165
    %vm1314 = vweird.f32 %v1307
    %vm1315 = vmor %vm1313, %vm1314
    %v1316 = vsel %vm1315, %v1307, %v1312
    %v1317 = vrsqrt.pop %v1166
    %v1318 = vmul.f32 %v1317, %v1166
    %v1319 = vmul.f32 %v1318, %v1317
    %v1320 = vmul.f32 0.5, %v1319
    %v1321 = vsub.f32 1.5, %v1320
    %v1322 = vmul.f32 %v1317, %v1321
    %vm1323 = vweird.f32 %v1166
    %vm1324 = vweird.f32 %v1317
    %vm1325 = vmor %vm1323, %vm1324
    %v1326 = vsel %vm1325, %v1317, %v1322
    %v1327 = vld [vmem:[#allocation5] sm:$0x1]
    %v1328 = vmul.f32 %v42, %v1176
    %v1329 = vmul.f32 %v43, %v1186
    %v1330 = vmul.f32 %v44, %v1196
    %v1331 = vmul.f32 %v45, %v1206
    %v1332 = vmul.f32 %v46, %v1216
    %v1333 = vmul.f32 %v47, %v1226
    %v1334 = vmul.f32 %v48, %v1236
    %v1335 = vmul.f32 %v49, %v1246
    %v1336 = vmul.f32 %v50, %v1256
    %v1337 = vmul.f32 %v51, %v1266
    %v1338 = vmul.f32 %v52, %v1276
    %v1339 = vmul.f32 %v53, %v1286
    %v1340 = vmul.f32 %v54, %v1296
    %v1341 = vmul.f32 %v55, %v1306
    %v1342 = vmul.f32 %v56, %v1316
    %v1343 = vmul.f32 %v57, %v1326
    %v1345 = vperm.slane %v1327, 0
    %v1347 = vmul.f32 %v1328, %v1345
    %v1348 = vmul.f32 %v1329, %v1345
    %v1349 = vmul.f32 %v1330, %v1345
    %v1350 = vmul.f32 %v1331, %v1345
    %v1351 = vmul.f32 %v1332, %v1345
    %v1352 = vmul.f32 %v1333, %v1345
    %v1353 = vmul.f32 %v1334, %v1345
    %v1354 = vmul.f32 %v1335, %v1345
    %v1355 = vmul.f32 %v1336, %v1345
    %v1356 = vmul.f32 %v1337, %v1345
    %v1357 = vmul.f32 %v1338, %v1345
    %v1358 = vmul.f32 %v1339, %v1345
    %v1359 = vmul.f32 %v1340, %v1345
    %v1360 = vmul.f32 %v1341, %v1345
    %v1361 = vmul.f32 %v1342, %v1345
    %v1362 = vmul.f32 %v1343, %v1345
    %1363 = vst [vmem:[#allocation7] sm:$0xff] %v1347
    %1364 = vst [vmem:[#allocation7 + $0x8] sm:$0xff] %v1348
    %1365 = vst [vmem:[#allocation7 + $0x10] sm:$0xff] %v1349
    %1366 = vst [vmem:[#allocation7 + $0x18] sm:$0xff] %v1350
    %1367 = vst [vmem:[#allocation7 + $0x20] sm:$0xff] %v1351
    %1368 = vst [vmem:[#allocation7 + $0x28] sm:$0xff] %v1352
    %1369 = vst [vmem:[#allocation7 + $0x30] sm:$0xff] %v1353
    %1370 = vst [vmem:[#allocation7 + $0x38] sm:$0xff] %v1354
    %1371 = vst [vmem:[#allocation7 + $0x40] sm:$0xff] %v1355
    %1372 = vst [vmem:[#allocation7 + $0x48] sm:$0xff] %v1356
    %1373 = vst [vmem:[#allocation7 + $0x50] sm:$0xff] %v1357
    %1374 = vst [vmem:[#allocation7 + $0x58] sm:$0xff] %v1358
    %1375 = vst [vmem:[#allocation7 + $0x60] sm:$0xff] %v1359
    %1376 = vst [vmem:[#allocation7 + $0x68] sm:$0xff] %v1360
    %1377 = vst [vmem:[#allocation7 + $0x70] sm:$0xff] %v1361
    %1378 = vst [vmem:[#allocation7 + $0x78] sm:$0xff] %v1362
    // Predicated region
    $region18: #{tpu_custom_call.1} parent=1 // pred_check
      _
    $region19: #{tpu_custom_call.1} parent=1 // pred_check_branch
      %1380 = sbr.rel (0) target = $region21
    $region20: #{tpu_custom_call.1} parent=1 // pred_region
      %1382 = vsyncadd [#allocation4], 0
      %s1383 = sshll.u32 [#allocation7], 4
      %s1384 = int_to_ptr.vmem [resolvable:$true] %s1383
      %s1385 = sshll.u32 %s2, 4
      %s1386 = int_to_ptr.hbm [resolvable:$true] %s1385
      %1391 = dma.vmem_to_hbm [thread:$0]  %s1384, 2048, %s1386, [#allocation4], 128, 128, 8
    $region21: #{tpu_custom_call.1} parent=1 // pred_fallthru
      _
    // Predicated region
    $region22: #{tpu_custom_call.1} parent=1 // pred_check
      _
    $region23: #{tpu_custom_call.1} parent=1 // pred_check_branch
      %1393 = sbr.rel (0) target = $region25
    $region24: #{tpu_custom_call.1} parent=1 // pred_region
      %1395 = dma.done [#allocation4], 2048
    $region25: #{tpu_custom_call.1} parent=1 // pred_fallthru
      _
    %1396 = vsyncpa [#allocation3], 1
    %1397 = vsyncpa [#allocation6], 1
    %1398 = vsyncpa [#allocation4], 1

</llo_original>
